<compile_context>
chip_gen: v5e
topology: v5e:2x2
jax: 0.10.0
libtpu: 0.0.40
codegen_flags: <defaults>
</compile_context>

<pallas_src>
import functools

import jax
import jax.numpy as jnp
from jax.experimental import pallas as pl
from jax.experimental.pallas import tpu as pltpu


def _round_up(v, m):
    return ((v + m - 1) // m) * m


# ----------------------------------------------------------------------------
# Exact (erf-based) GELU matching torch.nn.GELU().  erf uses the Eigen/XLA f32
# rational approximation; the final divide is routed to the EUP via
# pl.reciprocal (exact, approx=False) to keep the VALU slot free.
# ----------------------------------------------------------------------------
def _erf_f32(x):
    w = jnp.clip(x, -4.0, 4.0)
    s = w * w
    p = jnp.float32(-2.72614225801306e-10)
    for c in (2.77068142495902e-08, -2.10102402082508e-06, -5.69250639462346e-05,
              -7.34990630326855e-04, -2.95459980854025e-03, -1.60960333262415e-02):
        p = p * s + jnp.float32(c)
    p = p * w
    q = jnp.float32(-1.45660718464996e-05)
    for c in (-2.13374055278905e-04, -1.68282697438203e-03, -7.37332916720468e-03,
              -1.42647390514189e-02):
        q = q * s + jnp.float32(c)
    return p * pl.reciprocal(q)          # EUP-assisted; q is strictly negative (never 0)


def _gelu(x):
    return 0.5 * x * (1.0 + _erf_f32(x * jnp.float32(0.7071067811865476)))


# ----------------------------------------------------------------------------
# Generation-aware sizing.
# ----------------------------------------------------------------------------
def _device_profile():
    """VMEM scoped-limit and token-tile defaults per TPU generation."""
    try:
        kind = jax.devices()[0].device_kind.lower()
    except Exception:
        kind = ""
    if "v7" in kind:
        # 64 MiB physical per TC; keep >= 2 token tiles so both TCs get work.
        return {"vmem_limit": 44 << 20, "token_tile": 512}
    if "v6" in kind or "trillium" in kind:
        # 128 MiB physical, ridge ~650 flop/B -> big token tile.
        return {"vmem_limit": 100 << 20, "token_tile": 1024}
    if "v5 lite" in kind or "v5e" in kind or "v5lite" in kind:
        # 128 MiB physical but 16 MiB default scoped limit -> raise it explicitly.
        return {"vmem_limit": 96 << 20, "token_tile": 512}
    return {"vmem_limit": 64 << 20, "token_tile": 512}


def _expert_step_bytes(TN, H, Eblk, Eszc):
    """Per-grid-step VMEM footprint of the expert kernel (double-buffered blocks + temps)."""
    F = Eblk * Eszc
    dbl = 2
    weight_bytes = dbl * (2 * H * F        # W1 block   (bf16)
                          + 2 * F * H      # W2 block   (bf16)
                          + 4 * F          # b1 block   (f32)
                          + 2 * Eblk * H   # b2 block   (bf16)
                          + 2 * Eblk * F)  # Mexp       (bf16, grid-invariant)
    io_bytes = dbl * (2 * TN * H           # x tile     (bf16)
                      + 4 * TN * Eblk      # dispatch   (f32)
                      + 4 * TN * H)        # out tile   (f32)
    tmp_bytes = 12 * TN * F                # h (f32) + d_wide (f32) + hw (bf16) + headroom
    return weight_bytes + io_bytes + tmp_bytes


def _choose_tiling(N, H, E, Esz, *, budget, tn0):
    """Pick (token tile, expert block, Esz chunk) so a grid step fits the VMEM budget."""
    Eblk = E if E <= 128 else (128 if E % 128 == 0 else E)
    divs = [d for d in range(Esz, 0, -1) if Esz % d == 0]
    tn = max(int(tn0), 16)
    while True:
        TN = min(tn, _round_up(N, 16))
        for Eszc in divs:
            F = Eblk * Eszc
            if Eszc != Esz and F % 128 != 0:
                continue                     # chunked weight blocks must stay 128-lane aligned
            if _expert_step_bytes(TN, H, Eblk, Eszc) <= budget:
                return TN, Eblk, Eszc
        if tn <= 256:
            break
        tn //= 2
    TN = min(tn, _round_up(N, 16))
    for Eszc in reversed(divs):              # smallest legal chunk as last resort
        if Eszc == Esz or (Eblk * Eszc) % 128 == 0:
            return TN, Eblk, Eszc
    return TN, Eblk, Esz


# ----------------------------------------------------------------------------
# Kernel 1: hierarchical router, tiled over tokens.  Weights stay resident.
# Per-group softmax is done lane-dense with a group-membership matmul; both
# router outputs are fused into one lane-dense slab via 0/1 placement matmuls.
# ----------------------------------------------------------------------------
def _router_kernel(x_ref, wg_ref, bg_ref, we_ref, be_ref, prio_ref,
                   wc1_ref, bc1_ref, wc2_ref, bc2_ref, mgrp_ref, mgrpt_ref,
                   sel_e_ref, sel_g_ref, out_ref, *, inv_epg):
    x = x_ref[...]                                                      # [TN, H] bf16

    # Confidence estimator: Linear -> GELU -> Linear -> Sigmoid (f32 math)
    ch = _gelu(jnp.dot(x, wc1_ref[...], preferred_element_type=jnp.float32)
               + bc1_ref[...])                                          # [TN, H//4]
    conf = jax.nn.sigmoid(
        jnp.sum(ch * wc2_ref[...], axis=-1, keepdims=True) + bc2_ref[...])  # [TN, 1]

    # Group router
    glog = jnp.dot(x, wg_ref[...], preferred_element_type=jnp.float32) + bg_ref[...]
    gp = jax.nn.softmax(glog, axis=-1)                                  # [TN, G]

    # All expert routers at once, priority-scaled.  Grouped softmax: subtract the
    # per-row max (softmax is shift-invariant per group), exponentiate, compute
    # per-group denominators via z @ Mgrp and broadcast them back via @ Mgrp^T.
    elog = (jnp.dot(x, we_ref[...], preferred_element_type=jnp.float32)
            + be_ref[...]) * prio_ref[...]                              # [TN, E]
    z = jnp.exp(elog - jnp.max(elog, axis=-1, keepdims=True))
    gsum = jnp.dot(z, mgrp_ref[...], preferred_element_type=jnp.float32)      # [TN, G]
    den = jnp.dot(gsum, mgrpt_ref[...], preferred_element_type=jnp.float32)   # [TN, E]
    p = z * pl.reciprocal(den)                                          # EUP reciprocal
    ep = p * conf + (1.0 - conf) * inv_epg                              # confidence mixing

    # Single lane-dense store: [expert_probs | group_probs | zero pad] placed into a
    # 128-multiple-wide slab via tiny 0/1 placement matmuls (no masked vst.msk stores).
    out_ref[...] = (jnp.dot(ep, sel_e_ref[...], preferred_element_type=jnp.float32)
                    + jnp.dot(gp, sel_g_ref[...], preferred_element_type=jnp.float32))


def _router_call(x_bf16, sp, *, TN, G, E, epg, vmem_limit):
    N_pad, H = x_bf16.shape
    nt = N_pad // TN
    P = _round_up(G + E, 128)            # fused lane-dense output width

    def res(a):  # resident 2-D operand (same block every grid step)
        return pl.BlockSpec(a.shape, lambda i: (0, 0))
    # TODO(synk): mark resident weights pipeline_mode=pl.Buffered(1) to drop the second
    #             buffer once single-buffered constant blocks are load-bearing at large H.

    flops = 2 * N_pad * H * (G + E + H // 4) + 4 * N_pad * E * G + 2 * N_pad * (E + G) * P
    cost = pl.CostEstimate(
        flops=int(flops),
        transcendentals=int(N_pad * (E + G + 2)),
        bytes_accessed=int(2 * N_pad * H + 4 * N_pad * P
                           + nt * 2 * H * (G + E + H // 4)))

    kern = functools.partial(_router_kernel, inv_epg=1.0 / epg)
    fused = pl.pallas_call(
        kern,
        grid=(nt,),
        out_shape=jax.ShapeDtypeStruct((N_pad, P), jnp.float32),
        in_specs=[
            pl.BlockSpec((TN, H), lambda i: (i, 0)),   # x token tile
            res(sp['wg']), res(sp['bg']),
            res(sp['we']), res(sp['be']), res(sp['prio']),
            res(sp['wc1']), res(sp['bc1']), res(sp['wc2']), res(sp['bc2']),
            res(sp['mgrp']), res(sp['mgrpt']), res(sp['sel_e']), res(sp['sel_g']),
        ],
        out_specs=pl.BlockSpec((TN, P), lambda i: (i, 0)),
        compiler_params=pltpu.CompilerParams(
            dimension_semantics=("parallel",),
            vmem_limit_bytes=int(vmem_limit)),
        cost_estimate=cost,
    )(x_bf16, sp['wg'], sp['bg'], sp['we'], sp['be'], sp['prio'],
      sp['wc1'], sp['bc1'], sp['wc2'], sp['bc2'], sp['mgrp'], sp['mgrpt'],
      sp['sel_e'], sp['sel_g'])
    return fused[:, :E], fused[:, E:E + G]          # expert_probs, group_probs


# ----------------------------------------------------------------------------
# Routing glue (plain JAX): top-k selections, normalization, dispatch build.
# TODO(synk): top-k selection / index scatter has no clean Pallas TPU equivalent;
#             kept in plain JAX glue (it is not the compute hot path).
# ----------------------------------------------------------------------------
def _compute_dispatch(group_probs, expert_probs, *, top_k, G, epg):
    N = group_probs.shape[0]
    E = G * epg

    # top-2 group selection -> per-group selection weight
    tg = min(2, G)
    top_gp, top_gi = jax.lax.top_k(group_probs, tg)                      # [N, tg]
    gsel = jnp.sum(
        top_gp[:, :, None]
        * (top_gi[:, :, None] == jnp.arange(G)[None, None, :]).astype(jnp.float32),
        axis=1)                                                          # [N, G]

    # within-group top-k mask
    k_in = min(top_k, epg)
    ep3 = expert_probs.reshape(N, G, epg)
    _, top_e_idx = jax.lax.top_k(ep3, k_in)                              # [N, G, k_in]
    in_group_mask = jnp.sum(jax.nn.one_hot(top_e_idx, epg, dtype=jnp.float32), axis=2)

    scores = (ep3 * in_group_mask * gsel[:, :, None]).reshape(N, E)
    scores = scores / (jnp.sum(scores, axis=-1, keepdims=True) + 1e-9)

    # global top-k -> dispatch (== combine) tensor
    top_s, top_i = jax.lax.top_k(scores, top_k)
    disp = jnp.sum(jax.nn.one_hot(top_i, E, dtype=jnp.float32) * top_s[:, :, None],
                   axis=1)                                               # [N, E]
    return disp


# ----------------------------------------------------------------------------
# Kernel 2: expert MLP hot path.  grid = (token tiles, expert blocks, Esz chunks).
# The output block stays resident across both (arbitrary) weight axes and is
# accumulated into directly.  F = Eblk * Eszc columns of fused expert weights
# per step, sized against the VMEM budget.
# ----------------------------------------------------------------------------
def _expert_kernel(x_ref, w1_ref, b1_ref, w2_ref, b2_ref, disp_ref, mexp_ref, o_ref):
    eb = pl.program_id(1)
    c = pl.program_id(2)

    @pl.when(jnp.logical_and(eb == 0, c == 0))
    def _():
        o_ref[...] = jnp.zeros_like(o_ref)

    x = x_ref[...]                                                       # [TN, H]  bf16
    # One lane-dense matmul for the whole (expert block, Esz chunk): (TN,H) @ (H, F)
    h = _gelu(jnp.dot(x, w1_ref[...], preferred_element_type=jnp.float32)
              + b1_ref[...])                                             # [TN, F] f32
    # (Dropout is identity in eval mode.)

    d = disp_ref[...]                                                    # [TN, Eblk] f32
    d16 = d.astype(jnp.bfloat16)
    # Expand dispatch weights per expert to the chunk width with a bf16 0/1 expansion
    # matmul (lane-dense, avoids a lane-splitting reshape; bf16 is exact for 0/1).
    d_wide = jnp.dot(d16, mexp_ref[...], preferred_element_type=jnp.float32)   # [TN, F]
    hw = (h * d_wide).astype(jnp.bfloat16)

    # Dispatch-weighted second-layer bias, added once per expert block (chunk 0 only).
    @pl.when(c == 0)
    def _():
        o_ref[...] += jnp.dot(d16, b2_ref[...], preferred_element_type=jnp.float32)

    # Second layer for the whole chunk at once, accumulated into the resident output.
    o_ref[...] += jnp.dot(hw, w2_ref[...], preferred_element_type=jnp.float32)


def _experts_call(x_bf16, disp, sp, *, TN, H, E, Esz, Eblk, Eszc, vmem_limit):
    N_pad = x_bf16.shape[0]
    nt = N_pad // TN
    neb = E // Eblk
    nsc = Esz // Eszc
    F = Eblk * Eszc

    # TODO(synk): exploit top-k sparsity (PrefetchScalarGridSpec gather of tokens routed to
    #             each expert) instead of this dense dispatch-weighted sum; dense form is
    #             exact but does E/top_k more matmul FLOPs.

    weight_bytes = 2 * (2 * H * E * Esz) + 4 * E * Esz + 2 * E * H
    cost = pl.CostEstimate(
        flops=int(4 * N_pad * H * E * Esz + 2 * N_pad * Eblk * E * Esz + 2 * N_pad * E * H),
        transcendentals=int(N_pad * E * Esz),
        bytes_accessed=int(2 * N_pad * H + 4 * N_pad * E + 4 * N_pad * H
                           + nt * weight_bytes))

    def fb(eb, c):            # flat column/row block index of the (eb, c) weight block
        return eb * nsc + c

    return pl.pallas_call(
        _expert_kernel,
        out_shape=jax.ShapeDtypeStruct((N_pad, H), jnp.float32),
        grid=(nt, neb, nsc),
        in_specs=[
            pl.BlockSpec((TN, H), lambda i, eb, c: (i, 0)),          # x tile (resident)
            pl.BlockSpec((H, F), lambda i, eb, c: (0, fb(eb, c))),   # W1 block
            pl.BlockSpec((1, F), lambda i, eb, c: (0, fb(eb, c))),   # b1 block
            pl.BlockSpec((F, H), lambda i, eb, c: (fb(eb, c), 0)),   # W2 block
            pl.BlockSpec((Eblk, H), lambda i, eb, c: (eb, 0)),       # b2 block
            pl.BlockSpec((TN, Eblk), lambda i, eb, c: (i, eb)),      # dispatch block
            pl.BlockSpec((Eblk, F), lambda i, eb, c: (0, 0)),        # expansion matrix (invariant)
        ],
        out_specs=pl.BlockSpec((TN, H), lambda i, eb, c: (i, 0)),    # resident accumulator
        compiler_params=pltpu.CompilerParams(
            dimension_semantics=("parallel", "arbitrary", "arbitrary"),
            vmem_limit_bytes=int(vmem_limit)),
        cost_estimate=cost,
    )(x_bf16, sp['w1f'], sp['b1f'], sp['w2f'], sp['b2s'], disp, sp['mexp'])


# ----------------------------------------------------------------------------
# Parameter staging: bf16 MXU operands, expert weights flattened
# (expert-block, Esz-chunk)-major, group-membership / placement / expansion matrices.
# ----------------------------------------------------------------------------
def _stage_params(params, *, H, E, G, epg, Esz, Eblk, Eszc):
    neb, nsc = E // Eblk, Esz // Eszc
    P = _round_up(G + E, 128)

    # (E,H,Esz) -> columns ordered (expert_block, esz_chunk, expert_in_block, esz_in_chunk)
    w1 = params['w1'].reshape(neb, Eblk, H, nsc, Eszc)
    w1f = jnp.transpose(w1, (2, 0, 3, 1, 4)).reshape(H, E * Esz).astype(jnp.bfloat16)
    b1 = params['b1'].reshape(neb, Eblk, nsc, Eszc)
    b1f = jnp.transpose(b1, (0, 2, 1, 3)).reshape(1, E * Esz).astype(jnp.float32)
    w2 = params['w2'].reshape(neb, Eblk, nsc, Eszc, H)
    w2f = jnp.transpose(w2, (0, 2, 1, 3, 4)).reshape(E * Esz, H).astype(jnp.bfloat16)
    b2s = params['b2'].reshape(E, H).astype(jnp.bfloat16)

    # Block-diagonal dispatch-expansion blocks are identical -> stage only one (Eblk, F) block.
    mexp = jnp.repeat(jnp.eye(Eblk, dtype=jnp.bfloat16), Eszc, axis=1)    # (Eblk, Eblk*Eszc)
    # Group membership matrices (f32 exact).
    mgrp = jnp.repeat(jnp.eye(G, dtype=jnp.float32), epg, axis=0)         # (E, G)
    mgrpt = jnp.transpose(mgrp)                                           # (G, E)
    # Lane-placement matrices for the fused router output slab.
    sel_e = jnp.eye(E, P, dtype=jnp.float32)                              # expert probs @ lanes [0,E)
    sel_g = jnp.eye(G, P, k=E, dtype=jnp.float32)                         # group probs  @ lanes [E,E+G)

    return {
        'wg': params['wg'].astype(jnp.bfloat16), 'bg': params['bg'],
        'we': params['we'].astype(jnp.bfloat16), 'be': params['be'],
        'prio': params['prio'],
        'wc1': params['wc1'].astype(jnp.bfloat16), 'bc1': params['bc1'],
        'wc2': params['wc2'], 'bc2': params['bc2'],
        'mgrp': mgrp, 'mgrpt': mgrpt, 'sel_e': sel_e, 'sel_g': sel_g,
        'w1f': w1f, 'b1f': b1f, 'w2f': w2f, 'b2s': b2s, 'mexp': mexp,
    }


# ----------------------------------------------------------------------------
# Full forward
# ----------------------------------------------------------------------------
def self_refining_moe_forward(x, params, *, top_k, num_groups, token_tile=None):
    B, S, H = x.shape
    N = B * S
    E, _, Esz = params['w1'].shape
    G = num_groups
    epg = E // G

    prof = _device_profile()
    tn0 = prof['token_tile'] if token_tile is None else token_tile
    vmem_limit = prof['vmem_limit']
    TN, Eblk, Eszc = _choose_tiling(N, H, E, Esz, budget=int(0.85 * vmem_limit), tn0=tn0)
    N_pad = _round_up(N, TN)

    sp = _stage_params(params, H=H, E=E, G=G, epg=epg, Esz=Esz, Eblk=Eblk, Eszc=Eszc)

    # Flatten tokens and pad to a multiple of the token tile (padded rows are computed
    # but sliced off; they never touch real outputs).
    x_flat = x.reshape(N, H).astype(jnp.float32)
    if N_pad != N:
        x_flat = jnp.pad(x_flat, ((0, N_pad - N), (0, 0)))
    x_bf16 = x_flat.astype(jnp.bfloat16)

    expert_probs, group_probs = _router_call(
        x_bf16, sp, TN=TN, G=G, E=E, epg=epg, vmem_limit=vmem_limit)
    disp = _compute_dispatch(group_probs, expert_probs, top_k=top_k, G=G, epg=epg)

    out_flat = _experts_call(x_bf16, disp, sp, TN=TN, H=H, E=E, Esz=Esz,
                             Eblk=Eblk, Eszc=Eszc, vmem_limit=vmem_limit)

    out = out_flat[:N].reshape(B, S, H)
    aux_loss = jnp.float32(0.0)  # eval mode: no load-balance loss / jitter / refinement
    return out, aux_loss


# ----------------------------------------------------------------------------
# Deterministic parameter initialization (shapes match the torch module __init__,
# torch Linear weights pre-transposed to (in, out)).
# ----------------------------------------------------------------------------
def init_params(key, H, Esz, E, G):
    epg = E // G
    ks = jax.random.split(key, 12)

    def nrm(k, shape, scale):
        return jax.random.normal(k, shape, jnp.float32) * scale

    prio = jnp.ones((E,), jnp.float32).at[jnp.arange(0, E, epg)].set(1.2)

    return {
        # gating: group router (H->G), stacked expert routers (H->epg each, concat -> E)
        'wg':  nrm(ks[0], (H, G), 0.05),
        'bg':  nrm(ks[1], (1, G), 0.01),
        'we':  nrm(ks[2], (H, E), 0.05),
        'be':  nrm(ks[3], (1, E), 0.01),
        'prio': prio.reshape(1, E),
        # confidence estimator: Linear(H, H//4) -> GELU -> Linear(H//4, 1) -> Sigmoid
        'wc1': nrm(ks[4], (H, H // 4), 0.05),
        'bc1': nrm(ks[5], (1, H // 4), 0.01),
        'wc2': nrm(ks[6], (1, H // 4), 0.05),   # torch weight shape [1, H//4], used row-wise
        'bc2': nrm(ks[7], (1, 1), 0.01),
        # experts: Linear(H, Esz) -> GELU -> Dropout -> Linear(Esz, H)
        'w1':  nrm(ks[8], (E, H, Esz), 0.05),
        'b1':  nrm(ks[9], (E, 1, Esz), 0.01),
        'w2':  nrm(ks[10], (E, Esz, H), 0.05),
        'b2':  nrm(ks[11], (E, 1, H), 0.01),
        # expert_specialization exists in the torch module but is not used in forward.
    }


if __name__ == "__main__":
    B, S, H = 2, 8, 32
    EXPERT_SIZE = 64
    NUM_EXPERTS = 16
    NUM_GROUPS = 4
    EXPERTS_PER_TOKEN = 4

    key = jax.random.PRNGKey(0)
    kp, kx = jax.random.split(key)
    params = init_params(kp, H, EXPERT_SIZE, NUM_EXPERTS, NUM_GROUPS)
    x = jax.random.normal(kx, (B, S, H), jnp.float32)

    fwd = jax.jit(functools.partial(self_refining_moe_forward,
                                    top_k=EXPERTS_PER_TOKEN,
                                    num_groups=NUM_GROUPS))
    out, aux = fwd(x, params)
    jax.block_until_ready((out, aux))
    assert out.shape == (B, S, H)
    assert out.dtype == jnp.float32
    assert bool(jnp.all(jnp.isfinite(out)))
    print("KERNEL_OK")
</pallas_src>

<mosaic_0001>
module attributes {stable_mosaic.version = 11 : i64} {
  func.func @_router_kernel(%arg0: i32, %arg1: memref<16x32xbf16, #tpu.memory_space<vmem>>, %arg2: memref<32x4xbf16, #tpu.memory_space<vmem>>, %arg3: memref<1x4xf32, #tpu.memory_space<vmem>>, %arg4: memref<32x16xbf16, #tpu.memory_space<vmem>>, %arg5: memref<1x16xf32, #tpu.memory_space<vmem>>, %arg6: memref<1x16xf32, #tpu.memory_space<vmem>>, %arg7: memref<32x8xbf16, #tpu.memory_space<vmem>>, %arg8: memref<1x8xf32, #tpu.memory_space<vmem>>, %arg9: memref<1x8xf32, #tpu.memory_space<vmem>>, %arg10: memref<1x1xf32, #tpu.memory_space<vmem>>, %arg11: memref<16x4xf32, #tpu.memory_space<vmem>>, %arg12: memref<4x16xf32, #tpu.memory_space<vmem>>, %arg13: memref<16x128xf32, #tpu.memory_space<vmem>>, %arg14: memref<4x128xf32, #tpu.memory_space<vmem>>, %arg15: memref<16x128xf32, #tpu.memory_space<vmem>>) attributes {dimension_semantics = [#tpu.dimension_semantics<parallel>], iteration_bounds = array<i64: 1>, scalar_prefetch = 0 : i64, scratch_operands = 0 : i64, tpu.core_type = #tpu.core_type<tc>, window_params = [{transform_indices = @transform_0, window_bounds = array<i64: 16, 32>}, {pipeline_mode = #tpu.pipeline_mode<synchronous>, transform_indices = @transform_1, window_bounds = array<i64: 32, 4>}, {pipeline_mode = #tpu.pipeline_mode<synchronous>, transform_indices = @transform_2, window_bounds = array<i64: 1, 4>}, {pipeline_mode = #tpu.pipeline_mode<synchronous>, transform_indices = @transform_3, window_bounds = array<i64: 32, 16>}, {pipeline_mode = #tpu.pipeline_mode<synchronous>, transform_indices = @transform_4, window_bounds = array<i64: 1, 16>}, {pipeline_mode = #tpu.pipeline_mode<synchronous>, transform_indices = @transform_5, window_bounds = array<i64: 1, 16>}, {pipeline_mode = #tpu.pipeline_mode<synchronous>, transform_indices = @transform_6, window_bounds = array<i64: 32, 8>}, {pipeline_mode = #tpu.pipeline_mode<synchronous>, transform_indices = @transform_7, window_bounds = array<i64: 1, 8>}, {pipeline_mode = #tpu.pipeline_mode<synchronous>, transform_indices = @transform_8, window_bounds = array<i64: 1, 8>}, {pipeline_mode = #tpu.pipeline_mode<synchronous>, transform_indices = @transform_9, window_bounds = array<i64: 1, 1>}, {pipeline_mode = #tpu.pipeline_mode<synchronous>, transform_indices = @transform_10, window_bounds = array<i64: 16, 4>}, {pipeline_mode = #tpu.pipeline_mode<synchronous>, transform_indices = @transform_11, window_bounds = array<i64: 4, 16>}, {pipeline_mode = #tpu.pipeline_mode<synchronous>, transform_indices = @transform_12, window_bounds = array<i64: 16, 128>}, {pipeline_mode = #tpu.pipeline_mode<synchronous>, transform_indices = @transform_13, window_bounds = array<i64: 4, 128>}, {transform_indices = @transform_14, window_bounds = array<i64: 16, 128>}]} {
    %c0 = arith.constant 0 : index
    %c0_0 = arith.constant 0 : index
    %0 = vector.load %arg1[%c0, %c0_0] : memref<16x32xbf16, #tpu.memory_space<vmem>>, vector<16x32xbf16>
    %c0_1 = arith.constant 0 : index
    %c0_2 = arith.constant 0 : index
    %1 = vector.load %arg7[%c0_1, %c0_2] : memref<32x8xbf16, #tpu.memory_space<vmem>>, vector<32x8xbf16>
    %cst = arith.constant dense<0.000000e+00> : vector<16x8xf32>
    %2 = tpu.matmul %0, %1, %cst {dimension_numbers = #tpu.dot_dimension_numbers<[1], [0], [0], [1], [0, 0, 1, 1], [], []>} : vector<16x32xbf16>, vector<32x8xbf16>, vector<16x8xf32> -> vector<16x8xf32>
    %c0_3 = arith.constant 0 : index
    %c0_4 = arith.constant 0 : index
    %3 = vector.load %arg8[%c0_3, %c0_4] : memref<1x8xf32, #tpu.memory_space<vmem>>, vector<1x8xf32>
    %4 = vector.broadcast %3 : vector<1x8xf32> to vector<16x8xf32>
    %5 = arith.addf %2, %4 : vector<16x8xf32>
    %cst_5 = arith.constant 5.000000e-01 : f32
    %6 = vector.broadcast %cst_5 : f32 to vector<16x8xf32>
    %7 = arith.mulf %6, %5 : vector<16x8xf32>
    %cst_6 = arith.constant 0.707106769 : f32
    %8 = vector.broadcast %cst_6 : f32 to vector<16x8xf32>
    %9 = arith.mulf %5, %8 : vector<16x8xf32>
    %cst_7 = arith.constant -4.000000e+00 : f32
    %cst_8 = arith.constant 4.000000e+00 : f32
    %10 = vector.broadcast %cst_7 : f32 to vector<16x8xf32>
    %11 = arith.maximumf %10, %9 : vector<16x8xf32>
    %12 = vector.broadcast %cst_8 : f32 to vector<16x8xf32>
    %13 = arith.minimumf %12, %11 : vector<16x8xf32>
    %14 = arith.mulf %13, %13 : vector<16x8xf32>
    %cst_9 = arith.constant -2.72614237E-10 : f32
    %15 = vector.broadcast %cst_9 : f32 to vector<16x8xf32>
    %16 = arith.mulf %15, %14 : vector<16x8xf32>
    %cst_10 = arith.constant 2.77068146E-8 : f32
    %17 = vector.broadcast %cst_10 : f32 to vector<16x8xf32>
    %18 = arith.addf %16, %17 : vector<16x8xf32>
    %19 = arith.mulf %18, %14 : vector<16x8xf32>
    %cst_11 = arith.constant -2.10102394E-6 : f32
    %20 = vector.broadcast %cst_11 : f32 to vector<16x8xf32>
    %21 = arith.addf %19, %20 : vector<16x8xf32>
    %22 = arith.mulf %21, %14 : vector<16x8xf32>
    %cst_12 = arith.constant -5.69250624E-5 : f32
    %23 = vector.broadcast %cst_12 : f32 to vector<16x8xf32>
    %24 = arith.addf %22, %23 : vector<16x8xf32>
    %25 = arith.mulf %24, %14 : vector<16x8xf32>
    %cst_13 = arith.constant -7.34990637E-4 : f32
    %26 = vector.broadcast %cst_13 : f32 to vector<16x8xf32>
    %27 = arith.addf %25, %26 : vector<16x8xf32>
    %28 = arith.mulf %27, %14 : vector<16x8xf32>
    %cst_14 = arith.constant -2.954600e-03 : f32
    %29 = vector.broadcast %cst_14 : f32 to vector<16x8xf32>
    %30 = arith.addf %28, %29 : vector<16x8xf32>
    %31 = arith.mulf %30, %14 : vector<16x8xf32>
    %cst_15 = arith.constant -0.0160960332 : f32
    %32 = vector.broadcast %cst_15 : f32 to vector<16x8xf32>
    %33 = arith.addf %31, %32 : vector<16x8xf32>
    %34 = arith.mulf %33, %13 : vector<16x8xf32>
    %cst_16 = arith.constant -1.45660715E-5 : f32
    %35 = vector.broadcast %cst_16 : f32 to vector<16x8xf32>
    %36 = arith.mulf %35, %14 : vector<16x8xf32>
    %cst_17 = arith.constant -2.13374049E-4 : f32
    %37 = vector.broadcast %cst_17 : f32 to vector<16x8xf32>
    %38 = arith.addf %36, %37 : vector<16x8xf32>
    %39 = arith.mulf %38, %14 : vector<16x8xf32>
    %cst_18 = arith.constant -0.00168282702 : f32
    %40 = vector.broadcast %cst_18 : f32 to vector<16x8xf32>
    %41 = arith.addf %39, %40 : vector<16x8xf32>
    %42 = arith.mulf %41, %14 : vector<16x8xf32>
    %cst_19 = arith.constant -0.00737332925 : f32
    %43 = vector.broadcast %cst_19 : f32 to vector<16x8xf32>
    %44 = arith.addf %42, %43 : vector<16x8xf32>
    %45 = arith.mulf %44, %14 : vector<16x8xf32>
    %cst_20 = arith.constant -0.0142647391 : f32
    %46 = vector.broadcast %cst_20 : f32 to vector<16x8xf32>
    %47 = arith.addf %45, %46 : vector<16x8xf32>
    %48 = tpu.reciprocal %47 : vector<16x8xf32> -> vector<16x8xf32>
    %49 = arith.mulf %34, %48 : vector<16x8xf32>
    %cst_21 = arith.constant 1.000000e+00 : f32
    %50 = vector.broadcast %cst_21 : f32 to vector<16x8xf32>
    %51 = arith.addf %50, %49 : vector<16x8xf32>
    %52 = arith.mulf %7, %51 : vector<16x8xf32>
    %c0_22 = arith.constant 0 : index
    %c0_23 = arith.constant 0 : index
    %53 = vector.load %arg9[%c0_22, %c0_23] : memref<1x8xf32, #tpu.memory_space<vmem>>, vector<1x8xf32>
    %54 = vector.broadcast %53 : vector<1x8xf32> to vector<16x8xf32>
    %55 = arith.mulf %52, %54 : vector<16x8xf32>
    %cst_24 = arith.constant dense<0.000000e+00> : vector<16xf32>
    %56 = vector.multi_reduction <add>, %55, %cst_24 [1] : vector<16x8xf32> to vector<16xf32>
    %57 = vector.shape_cast %56 : vector<16xf32> to vector<16x1xf32>
    %c0_25 = arith.constant 0 : index
    %c0_26 = arith.constant 0 : index
    %58 = vector.load %arg10[%c0_25, %c0_26] : memref<1x1xf32, #tpu.memory_space<vmem>>, vector<1x1xf32>
    %59 = vector.broadcast %58 : vector<1x1xf32> to vector<16x1xf32>
    %60 = arith.addf %57, %59 : vector<16x1xf32>
    %61 = arith.negf %60 : vector<16x1xf32>
    %62 = math.exp %61 : vector<16x1xf32>
    %cst_27 = arith.constant 1.000000e+00 : f32
    %63 = vector.broadcast %cst_27 : f32 to vector<16x1xf32>
    %64 = arith.addf %63, %62 : vector<16x1xf32>
    %65 = arith.divf %63, %64 : vector<16x1xf32>
    %c0_28 = arith.constant 0 : index
    %c0_29 = arith.constant 0 : index
    %66 = vector.load %arg2[%c0_28, %c0_29] : memref<32x4xbf16, #tpu.memory_space<vmem>>, vector<32x4xbf16>
    %cst_30 = arith.constant dense<0.000000e+00> : vector<16x4xf32>
    %67 = tpu.matmul %0, %66, %cst_30 {dimension_numbers = #tpu.dot_dimension_numbers<[1], [0], [0], [1], [0, 0, 1, 1], [], []>} : vector<16x32xbf16>, vector<32x4xbf16>, vector<16x4xf32> -> vector<16x4xf32>
    %c0_31 = arith.constant 0 : index
    %c0_32 = arith.constant 0 : index
    %68 = vector.load %arg3[%c0_31, %c0_32] : memref<1x4xf32, #tpu.memory_space<vmem>>, vector<1x4xf32>
    %69 = vector.broadcast %68 : vector<1x4xf32> to vector<16x4xf32>
    %70 = arith.addf %67, %69 : vector<16x4xf32>
    %cst_33 = arith.constant dense<0xFF800000> : vector<16xf32>
    %71 = vector.multi_reduction <maximumf>, %70, %cst_33 [1] : vector<16x4xf32> to vector<16xf32>
    %cst_34 = arith.constant 0xFF800000 : f32
    %72 = vector.broadcast %cst_34 : f32 to vector<16xf32>
    %73 = arith.maximumf %72, %71 : vector<16xf32>
    %74 = vector.shape_cast %73 : vector<16xf32> to vector<16x1xf32>
    %75 = vector.broadcast %74 : vector<16x1xf32> to vector<16x4xf32>
    %76 = arith.subf %70, %75 : vector<16x4xf32>
    %77 = math.exp %76 : vector<16x4xf32>
    %cst_35 = arith.constant dense<0.000000e+00> : vector<16xf32>
    %78 = vector.multi_reduction <add>, %77, %cst_35 [1] : vector<16x4xf32> to vector<16xf32>
    %79 = vector.shape_cast %78 : vector<16xf32> to vector<16x1xf32>
    %80 = vector.broadcast %79 : vector<16x1xf32> to vector<16x4xf32>
    %81 = arith.divf %77, %80 : vector<16x4xf32>
    %c0_36 = arith.constant 0 : index
    %c0_37 = arith.constant 0 : index
    %82 = vector.load %arg4[%c0_36, %c0_37] : memref<32x16xbf16, #tpu.memory_space<vmem>>, vector<32x16xbf16>
    %cst_38 = arith.constant dense<0.000000e+00> : vector<16x16xf32>
    %83 = tpu.matmul %0, %82, %cst_38 {dimension_numbers = #tpu.dot_dimension_numbers<[1], [0], [0], [1], [0, 0, 1, 1], [], []>} : vector<16x32xbf16>, vector<32x16xbf16>, vector<16x16xf32> -> vector<16x16xf32>
    %c0_39 = arith.constant 0 : index
    %c0_40 = arith.constant 0 : index
    %84 = vector.load %arg5[%c0_39, %c0_40] : memref<1x16xf32, #tpu.memory_space<vmem>>, vector<1x16xf32>
    %85 = vector.broadcast %84 : vector<1x16xf32> to vector<16x16xf32>
    %86 = arith.addf %83, %85 : vector<16x16xf32>
    %c0_41 = arith.constant 0 : index
    %c0_42 = arith.constant 0 : index
    %87 = vector.load %arg6[%c0_41, %c0_42] : memref<1x16xf32, #tpu.memory_space<vmem>>, vector<1x16xf32>
    %88 = vector.broadcast %87 : vector<1x16xf32> to vector<16x16xf32>
    %89 = arith.mulf %86, %88 : vector<16x16xf32>
    %cst_43 = arith.constant dense<0xFF800000> : vector<16xf32>
    %90 = vector.multi_reduction <maximumf>, %89, %cst_43 [1] : vector<16x16xf32> to vector<16xf32>
    %91 = vector.shape_cast %90 : vector<16xf32> to vector<16x1xf32>
    %92 = vector.broadcast %91 : vector<16x1xf32> to vector<16x16xf32>
    %93 = arith.subf %89, %92 : vector<16x16xf32>
    %94 = math.exp %93 : vector<16x16xf32>
    %c0_44 = arith.constant 0 : index
    %c0_45 = arith.constant 0 : index
    %95 = vector.load %arg11[%c0_44, %c0_45] : memref<16x4xf32, #tpu.memory_space<vmem>>, vector<16x4xf32>
    %cst_46 = arith.constant dense<0.000000e+00> : vector<16x4xf32>
    %96 = tpu.matmul %94, %95, %cst_46 {dimension_numbers = #tpu.dot_dimension_numbers<[1], [0], [0], [1], [0, 0, 1, 1], [], []>} : vector<16x16xf32>, vector<16x4xf32>, vector<16x4xf32> -> vector<16x4xf32>
    %c0_47 = arith.constant 0 : index
    %c0_48 = arith.constant 0 : index
    %97 = vector.load %arg12[%c0_47, %c0_48] : memref<4x16xf32, #tpu.memory_space<vmem>>, vector<4x16xf32>
    %cst_49 = arith.constant dense<0.000000e+00> : vector<16x16xf32>
    %98 = tpu.matmul %96, %97, %cst_49 {dimension_numbers = #tpu.dot_dimension_numbers<[1], [0], [0], [1], [0, 0, 1, 1], [], []>} : vector<16x4xf32>, vector<4x16xf32>, vector<16x16xf32> -> vector<16x16xf32>
    %99 = tpu.reciprocal %98 : vector<16x16xf32> -> vector<16x16xf32>
    %100 = arith.mulf %94, %99 : vector<16x16xf32>
    %101 = vector.broadcast %65 : vector<16x1xf32> to vector<16x16xf32>
    %102 = arith.mulf %100, %101 : vector<16x16xf32>
    %cst_50 = arith.constant 1.000000e+00 : f32
    %103 = vector.broadcast %cst_50 : f32 to vector<16x1xf32>
    %104 = arith.subf %103, %65 : vector<16x1xf32>
    %cst_51 = arith.constant 2.500000e-01 : f32
    %105 = vector.broadcast %cst_51 : f32 to vector<16x1xf32>
    %106 = arith.mulf %104, %105 : vector<16x1xf32>
    %107 = vector.broadcast %106 : vector<16x1xf32> to vector<16x16xf32>
    %108 = arith.addf %102, %107 : vector<16x16xf32>
    %c0_52 = arith.constant 0 : index
    %c0_53 = arith.constant 0 : index
    %109 = vector.load %arg13[%c0_52, %c0_53] : memref<16x128xf32, #tpu.memory_space<vmem>>, vector<16x128xf32>
    %cst_54 = arith.constant dense<0.000000e+00> : vector<16x128xf32>
    %110 = tpu.matmul %108, %109, %cst_54 {dimension_numbers = #tpu.dot_dimension_numbers<[1], [0], [0], [1], [0, 0, 1, 1], [], []>} : vector<16x16xf32>, vector<16x128xf32>, vector<16x128xf32> -> vector<16x128xf32>
    %c0_55 = arith.constant 0 : index
    %c0_56 = arith.constant 0 : index
    %111 = vector.load %arg14[%c0_55, %c0_56] : memref<4x128xf32, #tpu.memory_space<vmem>>, vector<4x128xf32>
    %cst_57 = arith.constant dense<0.000000e+00> : vector<16x128xf32>
    %112 = tpu.matmul %81, %111, %cst_57 {dimension_numbers = #tpu.dot_dimension_numbers<[1], [0], [0], [1], [0, 0, 1, 1], [], []>} : vector<16x4xf32>, vector<4x128xf32>, vector<16x128xf32> -> vector<16x128xf32>
    %113 = arith.addf %110, %112 : vector<16x128xf32>
    %c0_58 = arith.constant 0 : index
    %c0_59 = arith.constant 0 : index
    %114 = vector.load %arg15[%c0_58, %c0_59] : memref<16x128xf32, #tpu.memory_space<vmem>>, vector<16x128xf32>
    tpu.vector_store %arg15[%c0_58, %c0_59], %113 {strides = array<i32>} : memref<16x128xf32, #tpu.memory_space<vmem>>, vector<16x128xf32>,
    return
  }
  func.func @transform_0(%arg0: i32) -> (i32, i32) {
    %c0_i32 = arith.constant 0 : i32
    %c0_i32_0 = arith.constant 0 : i32
    return %arg0, %c0_i32 : i32, i32
  }
  func.func @transform_1(%arg0: i32) -> (i32, i32) {
    %c0_i32 = arith.constant 0 : i32
    %c0_i32_0 = arith.constant 0 : i32
    %c0_i32_1 = arith.constant 0 : i32
    return %c0_i32, %c0_i32_0 : i32, i32
  }
  func.func @transform_2(%arg0: i32) -> (i32, i32) {
    %c0_i32 = arith.constant 0 : i32
    %c0_i32_0 = arith.constant 0 : i32
    %c0_i32_1 = arith.constant 0 : i32
    return %c0_i32, %c0_i32_0 : i32, i32
  }
  func.func @transform_3(%arg0: i32) -> (i32, i32) {
    %c0_i32 = arith.constant 0 : i32
    %c0_i32_0 = arith.constant 0 : i32
    %c0_i32_1 = arith.constant 0 : i32
    return %c0_i32, %c0_i32_0 : i32, i32
  }
  func.func @transform_4(%arg0: i32) -> (i32, i32) {
    %c0_i32 = arith.constant 0 : i32
    %c0_i32_0 = arith.constant 0 : i32
    %c0_i32_1 = arith.constant 0 : i32
    return %c0_i32, %c0_i32_0 : i32, i32
  }
  func.func @transform_5(%arg0: i32) -> (i32, i32) {
    %c0_i32 = arith.constant 0 : i32
    %c0_i32_0 = arith.constant 0 : i32
    %c0_i32_1 = arith.constant 0 : i32
    return %c0_i32, %c0_i32_0 : i32, i32
  }
  func.func @transform_6(%arg0: i32) -> (i32, i32) {
    %c0_i32 = arith.constant 0 : i32
    %c0_i32_0 = arith.constant 0 : i32
    %c0_i32_1 = arith.constant 0 : i32
    return %c0_i32, %c0_i32_0 : i32, i32
  }
  func.func @transform_7(%arg0: i32) -> (i32, i32) {
    %c0_i32 = arith.constant 0 : i32
    %c0_i32_0 = arith.constant 0 : i32
    %c0_i32_1 = arith.constant 0 : i32
    return %c0_i32, %c0_i32_0 : i32, i32
  }
  func.func @transform_8(%arg0: i32) -> (i32, i32) {
    %c0_i32 = arith.constant 0 : i32
    %c0_i32_0 = arith.constant 0 : i32
    %c0_i32_1 = arith.constant 0 : i32
    return %c0_i32, %c0_i32_0 : i32, i32
  }
  func.func @transform_9(%arg0: i32) -> (i32, i32) {
    %c0_i32 = arith.constant 0 : i32
    %c0_i32_0 = arith.constant 0 : i32
    %c0_i32_1 = arith.constant 0 : i32
    return %c0_i32, %c0_i32_0 : i32, i32
  }
  func.func @transform_10(%arg0: i32) -> (i32, i32) {
    %c0_i32 = arith.constant 0 : i32
    %c0_i32_0 = arith.constant 0 : i32
    %c0_i32_1 = arith.constant 0 : i32
    return %c0_i32, %c0_i32_0 : i32, i32
  }
  func.func @transform_11(%arg0: i32) -> (i32, i32) {
    %c0_i32 = arith.constant 0 : i32
    %c0_i32_0 = arith.constant 0 : i32
    %c0_i32_1 = arith.constant 0 : i32
    return %c0_i32, %c0_i32_0 : i32, i32
  }
  func.func @transform_12(%arg0: i32) -> (i32, i32) {
    %c0_i32 = arith.constant 0 : i32
    %c0_i32_0 = arith.constant 0 : i32
    %c0_i32_1 = arith.constant 0 : i32
    return %c0_i32, %c0_i32_0 : i32, i32
  }
  func.func @transform_13(%arg0: i32) -> (i32, i32) {
    %c0_i32 = arith.constant 0 : i32
    %c0_i32_0 = arith.constant 0 : i32
    %c0_i32_1 = arith.constant 0 : i32
    return %c0_i32, %c0_i32_0 : i32, i32
  }
  func.func @transform_14(%arg0: i32) -> (i32, i32) {
    %c0_i32 = arith.constant 0 : i32
    %c0_i32_0 = arith.constant 0 : i32
    return %arg0, %c0_i32 : i32, i32
  }
}

module attributes {stable_mosaic.version = 11 : i64} {
  func.func @_expert_kernel(%arg0: i32, %arg1: i32, %arg2: i32, %arg3: memref<16x32xbf16, #tpu.memory_space<vmem>>, %arg4: memref<32x1024xbf16, #tpu.memory_space<vmem>>, %arg5: memref<1x1024xf32, #tpu.memory_space<vmem>>, %arg6: memref<1024x32xbf16, #tpu.memory_space<vmem>>, %arg7: memref<16x32xbf16, #tpu.memory_space<vmem>>, %arg8: memref<16x16xf32, #tpu.memory_space<vmem>>, %arg9: memref<16x1024xbf16, #tpu.memory_space<vmem>>, %arg10: memref<16x32xf32, #tpu.memory_space<vmem>>) attributes {dimension_semantics = [#tpu.dimension_semantics<parallel>, #tpu.dimension_semantics<arbitrary>, #tpu.dimension_semantics<arbitrary>], iteration_bounds = array<i64: 1, 1, 1>, scalar_prefetch = 0 : i64, scratch_operands = 0 : i64, tpu.core_type = #tpu.core_type<tc>, window_params = [{transform_indices = @transform_0, window_bounds = array<i64: 16, 32>}, {transform_indices = @transform_1, window_bounds = array<i64: 32, 1024>}, {transform_indices = @transform_2, window_bounds = array<i64: 1, 1024>}, {transform_indices = @transform_3, window_bounds = array<i64: 1024, 32>}, {transform_indices = @transform_4, window_bounds = array<i64: 16, 32>}, {transform_indices = @transform_5, window_bounds = array<i64: 16, 16>}, {pipeline_mode = #tpu.pipeline_mode<synchronous>, transform_indices = @transform_6, window_bounds = array<i64: 16, 1024>}, {transform_indices = @transform_7, window_bounds = array<i64: 16, 32>}]} {
    %c0_i32 = arith.constant 0 : i32
    %0 = arith.cmpi eq, %arg1, %c0_i32 : i32
    %c0_i32_0 = arith.constant 0 : i32
    %1 = arith.cmpi eq, %arg2, %c0_i32_0 : i32
    %2 = arith.andi %0, %1 : i1
    %3 = arith.extui %2 : i1 to i32
    %c0_i32_1 = arith.constant 0 : i32
    %4 = arith.cmpi ne, %3, %c0_i32_1 : i32
    scf.if %4 {
      %cst_38 = arith.constant 0.000000e+00 : f32
      %72 = vector.broadcast %cst_38 : f32 to vector<16x32xf32>
      %c0_39 = arith.constant 0 : index
      %c0_40 = arith.constant 0 : index
      %73 = vector.load %arg10[%c0_39, %c0_40] : memref<16x32xf32, #tpu.memory_space<vmem>>, vector<16x32xf32>
      tpu.vector_store %arg10[%c0_39, %c0_40], %72 {strides = array<i32>} : memref<16x32xf32, #tpu.memory_space<vmem>>, vector<16x32xf32>,
    } else {
    }
    %c0 = arith.constant 0 : index
    %c0_2 = arith.constant 0 : index
    %5 = vector.load %arg3[%c0, %c0_2] : memref<16x32xbf16, #tpu.memory_space<vmem>>, vector<16x32xbf16>
    %c0_3 = arith.constant 0 : index
    %c0_4 = arith.constant 0 : index
    %6 = vector.load %arg4[%c0_3, %c0_4] : memref<32x1024xbf16, #tpu.memory_space<vmem>>, vector<32x1024xbf16>
    %cst = arith.constant dense<0.000000e+00> : vector<16x1024xf32>
    %7 = tpu.matmul %5, %6, %cst {dimension_numbers = #tpu.dot_dimension_numbers<[1], [0], [0], [1], [0, 0, 1, 1], [], []>} : vector<16x32xbf16>, vector<32x1024xbf16>, vector<16x1024xf32> -> vector<16x1024xf32>
    %c0_5 = arith.constant 0 : index
    %c0_6 = arith.constant 0 : index
    %8 = vector.load %arg5[%c0_5, %c0_6] : memref<1x1024xf32, #tpu.memory_space<vmem>>, vector<1x1024xf32>
    %9 = vector.broadcast %8 : vector<1x1024xf32> to vector<16x1024xf32>
    %10 = arith.addf %7, %9 : vector<16x1024xf32>
    %cst_7 = arith.constant 5.000000e-01 : f32
    %11 = vector.broadcast %cst_7 : f32 to vector<16x1024xf32>
    %12 = arith.mulf %11, %10 : vector<16x1024xf32>
    %cst_8 = arith.constant 0.707106769 : f32
    %13 = vector.broadcast %cst_8 : f32 to vector<16x1024xf32>
    %14 = arith.mulf %10, %13 : vector<16x1024xf32>
    %cst_9 = arith.constant -4.000000e+00 : f32
    %cst_10 = arith.constant 4.000000e+00 : f32
    %15 = vector.broadcast %cst_9 : f32 to vector<16x1024xf32>
    %16 = arith.maximumf %15, %14 : vector<16x1024xf32>
    %17 = vector.broadcast %cst_10 : f32 to vector<16x1024xf32>
    %18 = arith.minimumf %17, %16 : vector<16x1024xf32>
    %19 = arith.mulf %18, %18 : vector<16x1024xf32>
    %cst_11 = arith.constant -2.72614237E-10 : f32
    %20 = vector.broadcast %cst_11 : f32 to vector<16x1024xf32>
    %21 = arith.mulf %20, %19 : vector<16x1024xf32>
    %cst_12 = arith.constant 2.77068146E-8 : f32
    %22 = vector.broadcast %cst_12 : f32 to vector<16x1024xf32>
    %23 = arith.addf %21, %22 : vector<16x1024xf32>
    %24 = arith.mulf %23, %19 : vector<16x1024xf32>
    %cst_13 = arith.constant -2.10102394E-6 : f32
    %25 = vector.broadcast %cst_13 : f32 to vector<16x1024xf32>
    %26 = arith.addf %24, %25 : vector<16x1024xf32>
    %27 = arith.mulf %26, %19 : vector<16x1024xf32>
    %cst_14 = arith.constant -5.69250624E-5 : f32
    %28 = vector.broadcast %cst_14 : f32 to vector<16x1024xf32>
    %29 = arith.addf %27, %28 : vector<16x1024xf32>
    %30 = arith.mulf %29, %19 : vector<16x1024xf32>
    %cst_15 = arith.constant -7.34990637E-4 : f32
    %31 = vector.broadcast %cst_15 : f32 to vector<16x1024xf32>
    %32 = arith.addf %30, %31 : vector<16x1024xf32>
    %33 = arith.mulf %32, %19 : vector<16x1024xf32>
    %cst_16 = arith.constant -2.954600e-03 : f32
    %34 = vector.broadcast %cst_16 : f32 to vector<16x1024xf32>
    %35 = arith.addf %33, %34 : vector<16x1024xf32>
    %36 = arith.mulf %35, %19 : vector<16x1024xf32>
    %cst_17 = arith.constant -0.0160960332 : f32
    %37 = vector.broadcast %cst_17 : f32 to vector<16x1024xf32>
    %38 = arith.addf %36, %37 : vector<16x1024xf32>
    %39 = arith.mulf %38, %18 : vector<16x1024xf32>
    %cst_18 = arith.constant -1.45660715E-5 : f32
    %40 = vector.broadcast %cst_18 : f32 to vector<16x1024xf32>
    %41 = arith.mulf %40, %19 : vector<16x1024xf32>
    %cst_19 = arith.constant -2.13374049E-4 : f32
    %42 = vector.broadcast %cst_19 : f32 to vector<16x1024xf32>
    %43 = arith.addf %41, %42 : vector<16x1024xf32>
    %44 = arith.mulf %43, %19 : vector<16x1024xf32>
    %cst_20 = arith.constant -0.00168282702 : f32
    %45 = vector.broadcast %cst_20 : f32 to vector<16x1024xf32>
    %46 = arith.addf %44, %45 : vector<16x1024xf32>
    %47 = arith.mulf %46, %19 : vector<16x1024xf32>
    %cst_21 = arith.constant -0.00737332925 : f32
    %48 = vector.broadcast %cst_21 : f32 to vector<16x1024xf32>
    %49 = arith.addf %47, %48 : vector<16x1024xf32>
    %50 = arith.mulf %49, %19 : vector<16x1024xf32>
    %cst_22 = arith.constant -0.0142647391 : f32
    %51 = vector.broadcast %cst_22 : f32 to vector<16x1024xf32>
    %52 = arith.addf %50, %51 : vector<16x1024xf32>
    %53 = tpu.reciprocal %52 : vector<16x1024xf32> -> vector<16x1024xf32>
    %54 = arith.mulf %39, %53 : vector<16x1024xf32>
    %cst_23 = arith.constant 1.000000e+00 : f32
    %55 = vector.broadcast %cst_23 : f32 to vector<16x1024xf32>
    %56 = arith.addf %55, %54 : vector<16x1024xf32>
    %57 = arith.mulf %12, %56 : vector<16x1024xf32>
    %c0_24 = arith.constant 0 : index
    %c0_25 = arith.constant 0 : index
    %58 = vector.load %arg8[%c0_24, %c0_25] : memref<16x16xf32, #tpu.memory_space<vmem>>, vector<16x16xf32>
    %59 = arith.truncf %58 : vector<16x16xf32> to vector<16x16xbf16>
    %c0_26 = arith.constant 0 : index
    %c0_27 = arith.constant 0 : index
    %60 = vector.load %arg9[%c0_26, %c0_27] : memref<16x1024xbf16, #tpu.memory_space<vmem>>, vector<16x1024xbf16>
    %cst_28 = arith.constant dense<0.000000e+00> : vector<16x1024xf32>
    %61 = tpu.matmul %59, %60, %cst_28 {dimension_numbers = #tpu.dot_dimension_numbers<[1], [0], [0], [1], [0, 0, 1, 1], [], []>} : vector<16x16xbf16>, vector<16x1024xbf16>, vector<16x1024xf32> -> vector<16x1024xf32>
    %62 = arith.mulf %57, %61 : vector<16x1024xf32>
    %63 = arith.truncf %62 : vector<16x1024xf32> to vector<16x1024xbf16>
    %c0_i32_29 = arith.constant 0 : i32
    %64 = arith.cmpi eq, %arg2, %c0_i32_29 : i32
    %65 = arith.extui %64 : i1 to i32
    %c0_i32_30 = arith.constant 0 : i32
    %66 = arith.cmpi ne, %65, %c0_i32_30 : i32
    scf.if %66 {
      %c0_38 = arith.constant 0 : index
      %c0_39 = arith.constant 0 : index
      %72 = vector.load %arg10[%c0_38, %c0_39] : memref<16x32xf32, #tpu.memory_space<vmem>>, vector<16x32xf32>
      %c0_40 = arith.constant 0 : index
      %c0_41 = arith.constant 0 : index
      %73 = vector.load %arg7[%c0_40, %c0_41] : memref<16x32xbf16, #tpu.memory_space<vmem>>, vector<16x32xbf16>
      %cst_42 = arith.constant dense<0.000000e+00> : vector<16x32xf32>
      %74 = tpu.matmul %59, %73, %cst_42 {dimension_numbers = #tpu.dot_dimension_numbers<[1], [0], [0], [1], [0, 0, 1, 1], [], []>} : vector<16x16xbf16>, vector<16x32xbf16>, vector<16x32xf32> -> vector<16x32xf32>
      %75 = arith.addf %72, %74 : vector<16x32xf32>
      %c0_43 = arith.constant 0 : index
      %c0_44 = arith.constant 0 : index
      %76 = vector.load %arg10[%c0_43, %c0_44] : memref<16x32xf32, #tpu.memory_space<vmem>>, vector<16x32xf32>
      tpu.vector_store %arg10[%c0_43, %c0_44], %75 {strides = array<i32>} : memref<16x32xf32, #tpu.memory_space<vmem>>, vector<16x32xf32>,
    } else {
    }
    %c0_31 = arith.constant 0 : index
    %c0_32 = arith.constant 0 : index
    %67 = vector.load %arg10[%c0_31, %c0_32] : memref<16x32xf32, #tpu.memory_space<vmem>>, vector<16x32xf32>
    %c0_33 = arith.constant 0 : index
    %c0_34 = arith.constant 0 : index
    %68 = vector.load %arg6[%c0_33, %c0_34] : memref<1024x32xbf16, #tpu.memory_space<vmem>>, vector<1024x32xbf16>
    %cst_35 = arith.constant dense<0.000000e+00> : vector<16x32xf32>
    %69 = tpu.matmul %63, %68, %cst_35 {dimension_numbers = #tpu.dot_dimension_numbers<[1], [0], [0], [1], [0, 0, 1, 1], [], []>} : vector<16x1024xbf16>, vector<1024x32xbf16>, vector<16x32xf32> -> vector<16x32xf32>
    %70 = arith.addf %67, %69 : vector<16x32xf32>
    %c0_36 = arith.constant 0 : index
    %c0_37 = arith.constant 0 : index
    %71 = vector.load %arg10[%c0_36, %c0_37] : memref<16x32xf32, #tpu.memory_space<vmem>>, vector<16x32xf32>
    tpu.vector_store %arg10[%c0_36, %c0_37], %70 {strides = array<i32>} : memref<16x32xf32, #tpu.memory_space<vmem>>, vector<16x32xf32>,
    return
  }
  func.func @transform_0(%arg0: i32, %arg1: i32, %arg2: i32) -> (i32, i32) {
    %c0_i32 = arith.constant 0 : i32
    %c0_i32_0 = arith.constant 0 : i32
    return %arg0, %c0_i32 : i32, i32
  }
  func.func @transform_1(%arg0: i32, %arg1: i32, %arg2: i32) -> (i32, i32) {
    %c1_i32 = arith.constant 1 : i32
    %0 = arith.muli %arg1, %c1_i32 : i32
    %1 = arith.addi %0, %arg2 : i32
    %c0_i32 = arith.constant 0 : i32
    %c0_i32_0 = arith.constant 0 : i32
    return %c0_i32, %1 : i32, i32
  }
  func.func @transform_2(%arg0: i32, %arg1: i32, %arg2: i32) -> (i32, i32) {
    %c1_i32 = arith.constant 1 : i32
    %0 = arith.muli %arg1, %c1_i32 : i32
    %1 = arith.addi %0, %arg2 : i32
    %c0_i32 = arith.constant 0 : i32
    %c0_i32_0 = arith.constant 0 : i32
    return %c0_i32, %1 : i32, i32
  }
  func.func @transform_3(%arg0: i32, %arg1: i32, %arg2: i32) -> (i32, i32) {
    %c1_i32 = arith.constant 1 : i32
    %0 = arith.muli %arg1, %c1_i32 : i32
    %1 = arith.addi %0, %arg2 : i32
    %c0_i32 = arith.constant 0 : i32
    %c0_i32_0 = arith.constant 0 : i32
    return %1, %c0_i32 : i32, i32
  }
  func.func @transform_4(%arg0: i32, %arg1: i32, %arg2: i32) -> (i32, i32) {
    %c0_i32 = arith.constant 0 : i32
    %c0_i32_0 = arith.constant 0 : i32
    return %arg1, %c0_i32 : i32, i32
  }
  func.func @transform_5(%arg0: i32, %arg1: i32, %arg2: i32) -> (i32, i32) {
    %c0_i32 = arith.constant 0 : i32
    return %arg0, %arg1 : i32, i32
  }
  func.func @transform_6(%arg0: i32, %arg1: i32, %arg2: i32) -> (i32, i32) {
    %c0_i32 = arith.constant 0 : i32
    %c0_i32_0 = arith.constant 0 : i32
    %c0_i32_1 = arith.constant 0 : i32
    return %c0_i32, %c0_i32_0 : i32, i32
  }
  func.func @transform_7(%arg0: i32, %arg1: i32, %arg2: i32) -> (i32, i32) {
    %c0_i32 = arith.constant 0 : i32
    %c0_i32_0 = arith.constant 0 : i32
    return %arg0, %c0_i32 : i32, i32
  }
}

</mosaic_0001>

<llo_original>
// kernel: self_refining_moe_forward.2
$region0: #{self_refining_moe_forward.2}
  #allocation0 [shape = 'u32[]', space=smem, size = 0x4, offset = 0x4, fixed_abs, tag = 'smem constant byte address 0x4 - core index']
  #allocation1 [shape = 'u32[72,128]{1,0:T(1,128)}', space=vmem, size = 0x9000, scoped, tag = 'internal scratch']
  #allocation2 [shape = 'f32[1,1]{1,0:T(1,128)S(1)}', space=vmem, size = 0x200, scoped, tag = 'scoped memory for self_refining_moe_forward.2']
  %s0 = inlined_call_operand.vmem [shape: bf16[16,32], index: 0, kind: input, shape index: {}]
  %s1 = inlined_call_operand.vmem [shape: bf16[32,4], index: 1, kind: input, shape index: {}]
  %s2 = inlined_call_operand.vmem [shape: f32[1,4], index: 2, kind: input, shape index: {}]
  %s3 = inlined_call_operand.vmem [shape: bf16[32,16], index: 3, kind: input, shape index: {}]
  %s4 = inlined_call_operand.vmem [shape: f32[1,16], index: 4, kind: input, shape index: {}]
  %s5 = inlined_call_operand.vmem [shape: f32[1,16], index: 5, kind: input, shape index: {}]
  %s6 = inlined_call_operand.vmem [shape: bf16[32,8], index: 6, kind: input, shape index: {}]
  %s7 = inlined_call_operand.vmem [shape: f32[1,8], index: 7, kind: input, shape index: {}]
  %s8 = inlined_call_operand.vmem [shape: f32[1,8], index: 8, kind: input, shape index: {}]
  %s9 = inlined_call_operand.<no memory space> [shape: f32[1,1], index: 9, kind: input, shape index: {}]
  %s10 = inlined_call_operand.vmem [shape: f32[16,4], index: 10, kind: input, shape index: {}]
  %s11 = inlined_call_operand.vmem [shape: f32[4,16], index: 11, kind: input, shape index: {}]
  %s12 = inlined_call_operand.vmem [shape: f32[16,128], index: 12, kind: input, shape index: {}]
  %s13 = inlined_call_operand.vmem [shape: f32[4,128], index: 13, kind: input, shape index: {}]
  %s14 = inlined_call_operand.vmem [shape: f32[16,128], index: 14, kind: output, shape index: {}]
  %s15 = sld [smem:[#allocation0]]
  $region66: #{self_refining_moe_forward.2} parent=0
    _
  %s17 = ssub.s32 1, %s15
  %s18 = scalar_select 0, %s17, %s15
  %v19 = vstv %s9
  %20 = vst [vmem:[#allocation2] sm:$0x1] %v19
  // Predicated region
  $region2: #{self_refining_moe_forward.2} parent=0 // pred_check
    _
  $region3: #{self_refining_moe_forward.2} parent=0 // pred_check_branch
    %22 = sbr.rel (0) target = $region5
  $region4: #{self_refining_moe_forward.2} parent=0 // pred_region
    _
  $region5: #{self_refining_moe_forward.2} parent=0 // pred_fallthru
    _
  // Predicated region
  $region6: #{self_refining_moe_forward.2} parent=0 // pred_check
    _
  $region7: #{self_refining_moe_forward.2} parent=0 // pred_check_branch
    %24 = sbr.rel (0) target = $region9
  $region8: #{self_refining_moe_forward.2} parent=0 // pred_region
    _
  $region9: #{self_refining_moe_forward.2} parent=0 // pred_fallthru
    _
  // Predicated region
  $region10: #{self_refining_moe_forward.2} parent=0 // pred_check
    _
  $region11: #{self_refining_moe_forward.2} parent=0 // pred_check_branch
    %26 = sbr.rel (0) target = $region13
  $region12: #{self_refining_moe_forward.2} parent=0 // pred_region
    _
  $region13: #{self_refining_moe_forward.2} parent=0 // pred_fallthru
    _
  // Predicated region
  $region14: #{self_refining_moe_forward.2} parent=0 // pred_check
    _
  $region15: #{self_refining_moe_forward.2} parent=0 // pred_check_branch
    %28 = sbr.rel (0) target = $region17
  $region16: #{self_refining_moe_forward.2} parent=0 // pred_region
    _
  $region17: #{self_refining_moe_forward.2} parent=0 // pred_fallthru
    _
  // Predicated region
  $region18: #{self_refining_moe_forward.2} parent=0 // pred_check
    _
  $region19: #{self_refining_moe_forward.2} parent=0 // pred_check_branch
    %30 = sbr.rel (0) target = $region21
  $region20: #{self_refining_moe_forward.2} parent=0 // pred_region
    _
  $region21: #{self_refining_moe_forward.2} parent=0 // pred_fallthru
    _
  // Predicated region
  $region22: #{self_refining_moe_forward.2} parent=0 // pred_check
    _
  $region23: #{self_refining_moe_forward.2} parent=0 // pred_check_branch
    %32 = sbr.rel (0) target = $region25
  $region24: #{self_refining_moe_forward.2} parent=0 // pred_region
    _
  $region25: #{self_refining_moe_forward.2} parent=0 // pred_fallthru
    _
  // Predicated region
  $region26: #{self_refining_moe_forward.2} parent=0 // pred_check
    _
  $region27: #{self_refining_moe_forward.2} parent=0 // pred_check_branch
    %34 = sbr.rel (0) target = $region29
  $region28: #{self_refining_moe_forward.2} parent=0 // pred_region
    _
  $region29: #{self_refining_moe_forward.2} parent=0 // pred_fallthru
    _
  // Predicated region
  $region30: #{self_refining_moe_forward.2} parent=0 // pred_check
    _
  $region31: #{self_refining_moe_forward.2} parent=0 // pred_check_branch
    %36 = sbr.rel (0) target = $region33
  $region32: #{self_refining_moe_forward.2} parent=0 // pred_region
    _
  $region33: #{self_refining_moe_forward.2} parent=0 // pred_fallthru
    _
  // Predicated region
  $region34: #{self_refining_moe_forward.2} parent=0 // pred_check
    _
  $region35: #{self_refining_moe_forward.2} parent=0 // pred_check_branch
    %38 = sbr.rel (0) target = $region37
  $region36: #{self_refining_moe_forward.2} parent=0 // pred_region
    _
  $region37: #{self_refining_moe_forward.2} parent=0 // pred_fallthru
    _
  // Predicated region
  $region38: #{self_refining_moe_forward.2} parent=0 // pred_check
    _
  $region39: #{self_refining_moe_forward.2} parent=0 // pred_check_branch
    %40 = sbr.rel (0) target = $region41
  $region40: #{self_refining_moe_forward.2} parent=0 // pred_region
    _
  $region41: #{self_refining_moe_forward.2} parent=0 // pred_fallthru
    _
  // Predicated region
  $region42: #{self_refining_moe_forward.2} parent=0 // pred_check
    _
  $region43: #{self_refining_moe_forward.2} parent=0 // pred_check_branch
    %42 = sbr.rel (0) target = $region45
  $region44: #{self_refining_moe_forward.2} parent=0 // pred_region
    _
  $region45: #{self_refining_moe_forward.2} parent=0 // pred_fallthru
    _
  // Predicated region
  $region46: #{self_refining_moe_forward.2} parent=0 // pred_check
    _
  $region47: #{self_refining_moe_forward.2} parent=0 // pred_check_branch
    %44 = sbr.rel (0) target = $region49
  $region48: #{self_refining_moe_forward.2} parent=0 // pred_region
    _
  $region49: #{self_refining_moe_forward.2} parent=0 // pred_fallthru
    _
  // Predicated region
  $region50: #{self_refining_moe_forward.2} parent=0 // pred_check
    _
  $region51: #{self_refining_moe_forward.2} parent=0 // pred_check_branch
    %46 = sbr.rel (0) target = $region53
  $region52: #{self_refining_moe_forward.2} parent=0 // pred_region
    _
  $region53: #{self_refining_moe_forward.2} parent=0 // pred_fallthru
    _
  // Predicated region
  $region54: #{self_refining_moe_forward.2} parent=0 // pred_check
    _
  $region55: #{self_refining_moe_forward.2} parent=0 // pred_check_branch
    %48 = sbr.rel (0) target = $region57
  $region56: #{self_refining_moe_forward.2} parent=0 // pred_region
    _
  $region57: #{self_refining_moe_forward.2} parent=0 // pred_fallthru
    _
  %v50 = vld [vmem:[%s0] sm:$0xf]
  %v51 = vld [vmem:[%s0 + $0x4] sm:$0xf]
  %v52 = vld [vmem:[%s6] sm:$0xf]
  %v53 = vld [vmem:[%s6 + $0x4] sm:$0xf]
  %v54 = vld [vmem:[%s6 + $0x8] sm:$0xf]
  %v55 = vld [vmem:[%s6 + $0xc] sm:$0xf]
  %v56 = vld [vmem:[%s7] sm:$0x1]
  %v58 = vperm.slane %v56, 0
  %v62 = vunpack.c.l.b16 %v50
  %v63 = vunpack.c.l.b16 %v51
  %v64 = vpack.c.b16 %v63, %v62
  %v69 = vunpack.c.l.b16 %v52
  %v70 = vunpack.c.l.b16 %v53
  %v71 = vunpack.c.l.b16 %v54
  %v72 = vunpack.c.l.b16 %v55
  %v73 = vpack.c.b16 %v70, %v69
  %v74 = vpack.c.b16 %v72, %v71
  %vm77 = vcmask 261120
  %v79 = vsel %vm77, %v64, 0
  %81 = vmatpush.bf16.msra.mxu0 0
  %82 = vmatpush.bf16.msra.mxu0 0
  %83 = vmatpush.bf16.msra.mxu0 0
  %84 = vmatpush.bf16.msra.mxu0 0
  %85 = vmatpush.bf16.msra.mxu0 0
  %86 = vmatpush.bf16.msra.mxu0 0
  %87 = vmatpush.bf16.msra.mxu0 %v74
  %88 = vmatpush.bf16.msra.mxu0 %v73
  %89 = vmatmul.bf16.gmra.mxu0 %v79
  %v90 = vpop.f32.mrf.mxu0
  %v91 = vadd.f32 %v58, %v90
  %v92 = vpop.f32.mrf.mxu0
  %v93 = vadd.f32 %v58, %v92
  %94 = vdwg.mxu0
  %v95 = vmul.f32 %v91, 0.5
  %v96 = vmul.f32 %v93, 0.5
  %v97 = vmul.f32 %v91, 0.70710677
  %v98 = vmul.f32 %v93, 0.70710677
  %v99 = vmax.f32 %v97, -4.0
  %v100 = vmax.f32 %v98, -4.0
  %v101 = vmin.f32 %v99, 4.0
  %v102 = vmin.f32 %v100, 4.0
  %v103 = vmul.f32 %v101, %v101
  %v104 = vmul.f32 %v102, %v102
  %v105 = vmul.f32 %v103, -2.7261424e-10
  %v106 = vmul.f32 %v104, -2.7261424e-10
  %v107 = vadd.f32 %v105, 2.7706815e-08
  %v108 = vadd.f32 %v106, 2.7706815e-08
  %v109 = vmul.f32 %v107, %v103
  %v110 = vmul.f32 %v108, %v104
  %v111 = vadd.f32 %v109, -2.101024e-06
  %v112 = vadd.f32 %v110, -2.101024e-06
  %v113 = vmul.f32 %v111, %v103
  %v114 = vmul.f32 %v112, %v104
  %v115 = vadd.f32 %v113, -5.6925062e-05
  %v116 = vadd.f32 %v114, -5.6925062e-05
  %v117 = vmul.f32 %v115, %v103
  %v118 = vmul.f32 %v116, %v104
  %v119 = vadd.f32 %v117, -0.00073499064
  %v120 = vadd.f32 %v118, -0.00073499064
  %v121 = vmul.f32 %v119, %v103
  %v122 = vmul.f32 %v120, %v104
  %v123 = vadd.f32 %v121, -0.0029546
  %v124 = vadd.f32 %v122, -0.0029546
  %v125 = vmul.f32 %v123, %v103
  %v126 = vmul.f32 %v124, %v104
  %v127 = vadd.f32 %v125, -0.016096033
  %v128 = vadd.f32 %v126, -0.016096033
  %v129 = vmul.f32 %v127, %v101
  %v130 = vmul.f32 %v128, %v102
  %v131 = vmul.f32 %v103, -1.45660715e-05
  %v132 = vmul.f32 %v104, -1.45660715e-05
  %v133 = vadd.f32 %v131, -0.00021337405
  %v134 = vadd.f32 %v132, -0.00021337405
  %v135 = vmul.f32 %v133, %v103
  %v136 = vmul.f32 %v134, %v104
  %v137 = vadd.f32 %v135, -0.001682827
  %v138 = vadd.f32 %v136, -0.001682827
  %v139 = vmul.f32 %v137, %v103
  %v140 = vmul.f32 %v138, %v104
  %v141 = vadd.f32 %v139, -0.0073733293
  %v142 = vadd.f32 %v140, -0.0073733293
  %v143 = vmul.f32 %v141, %v103
  %v144 = vmul.f32 %v142, %v104
  %v145 = vadd.f32 %v143, -0.014264739
  %v146 = vadd.f32 %v144, -0.014264739
  %v147 = vrcp.pop %v145
  %v148 = vmul.f32 %v145, %v147
  %v149 = vsub.f32 1.0, %v148
  %v150 = vmul.f32 %v147, %v149
  %v151 = vadd.f32 %v147, %v150
  %vm152 = vweird.f32 %v145
  %vm153 = vweird.f32 %v147
  %vm154 = vmor %vm152, %vm153
  %v155 = vsel %vm154, %v147, %v151
  %v156 = vand.u32 2147483647, %v145
  %vm157 = vcmp.eq.f32.partialorder %v156, 8.507059e+37
  %v158 = vand.u32 %v145, 2147483648
  %v159 = vor.u32 1.1754944e-38, %v158
  %v160 = vsel %vm157, %v159, %v155
  %v161 = vrcp.pop %v146
  %v162 = vmul.f32 %v146, %v161
  %v163 = vsub.f32 1.0, %v162
  %v164 = vmul.f32 %v161, %v163
  %v165 = vadd.f32 %v161, %v164
  %vm166 = vweird.f32 %v146
  %vm167 = vweird.f32 %v161
  %vm168 = vmor %vm166, %vm167
  %v169 = vsel %vm168, %v161, %v165
  %v170 = vand.u32 2147483647, %v146
  %vm171 = vcmp.eq.f32.partialorder %v170, 8.507059e+37
  %v172 = vand.u32 %v146, 2147483648
  %v173 = vor.u32 1.1754944e-38, %v172
  %v174 = vsel %vm171, %v173, %v169
  %v175 = vmul.f32 %v129, %v160
  %v176 = vmul.f32 %v130, %v174
  %v177 = vadd.f32 %v175, 1.0
  %v178 = vadd.f32 %v176, 1.0
  %v179 = vmul.f32 %v95, %v177
  %v180 = vmul.f32 %v96, %v178
  %v181 = vld [vmem:[%s8] sm:$0x1]
  %v183 = vperm.slane %v181, 0
  %v185 = vmul.f32 %v179, %v183
  %v186 = vmul.f32 %v180, %v183
  %vm187 = vcmask 64512
  %v188 = vsel %vm187, %v185, 0.0
  %189 = vadd.xlane.f32.xlu0 %v188
  %v190 = vpop.xlane.xlu0 %189
  %v191 = vsel %vm187, %v186, 0.0
  %192 = vadd.xlane.f32.xlu0 %v191
  %v193 = vpop.xlane.xlu0 %192
  %v194 = vld [vmem:[#allocation2] sm:$0x1]
  %v196 = vperm.slane %v194, 0
  %v198 = vadd.f32 %v190, %v196
  %v199 = vadd.f32 %v193, %v196
  %v200 = vxor.u32 %v198, 2147483648
  %v201 = vxor.u32 %v199, 2147483648
  %v202 = vmul.f32 %v200, 1.442695
  %v203 = vpow.pop %v202
  %v204 = vmul.f32 %v201, 1.442695
  %v205 = vpow.pop %v204
  %v206 = vadd.f32 %v203, 1.0
  %v207 = vadd.f32 %v205, 1.0
  %v208 = vrcp.pop %v206
  %v209 = vmul.f32 %v206, %v208
  %v210 = vsub.f32 1.0, %v209
  %v211 = vmul.f32 %v208, %v210
  %v212 = vadd.f32 %v208, %v211
  %vm213 = vweird.f32 %v206
  %vm214 = vweird.f32 %v208
  %vm215 = vmor %vm213, %vm214
  %v216 = vsel %vm215, %v208, %v212
  %v217 = vand.u32 2147483647, %v206
  %vm218 = vcmp.eq.f32.partialorder %v217, 8.507059e+37
  %v219 = vand.u32 %v206, 2147483648
  %v220 = vor.u32 1.1754944e-38, %v219
  %v221 = vsel %vm218, %v220, %v216
  %v222 = vmul.f32 1.0, %v221
  %v223 = vrcp.pop %v207
  %v224 = vmul.f32 %v207, %v223
  %v225 = vsub.f32 1.0, %v224
  %v226 = vmul.f32 %v223, %v225
  %v227 = vadd.f32 %v223, %v226
  %vm228 = vweird.f32 %v207
  %vm229 = vweird.f32 %v223
  %vm230 = vmor %vm228, %vm229
  %v231 = vsel %vm230, %v223, %v227
  %v232 = vand.u32 2147483647, %v207
  %vm233 = vcmp.eq.f32.partialorder %v232, 8.507059e+37
  %v234 = vand.u32 %v207, 2147483648
  %v235 = vor.u32 1.1754944e-38, %v234
  %v236 = vsel %vm233, %v235, %v231
  %v237 = vmul.f32 1.0, %v236
  %v238 = vld [vmem:[%s1] sm:$0xf]
  %v239 = vld [vmem:[%s1 + $0x4] sm:$0xf]
  %v240 = vld [vmem:[%s1 + $0x8] sm:$0xf]
  %v241 = vld [vmem:[%s1 + $0xc] sm:$0xf]
  %v242 = vld [vmem:[%s2] sm:$0x1]
  %v244 = vperm.slane %v242, 0
  %v250 = vunpack.c.l.b16 %v238
  %v251 = vunpack.c.l.b16 %v239
  %v252 = vunpack.c.l.b16 %v240
  %v253 = vunpack.c.l.b16 %v241
  %v254 = vpack.c.b16 %v251, %v250
  %v255 = vpack.c.b16 %v253, %v252
  %258 = vmatpush.bf16.msra.mxu0 0
  %259 = vmatpush.bf16.msra.mxu0 0
  %260 = vmatpush.bf16.msra.mxu0 0
  %261 = vmatpush.bf16.msra.mxu0 0
  %262 = vmatpush.bf16.msra.mxu0 0
  %263 = vmatpush.bf16.msra.mxu0 0
  %264 = vmatpush.bf16.msra.mxu0 %v255
  %265 = vmatpush.bf16.msra.mxu0 %v254
  %266 = vmatmul.bf16.gmra.mxu0 %v79
  %v267 = vpop.f32.mrf.mxu0
  %v268 = vadd.f32 %v244, %v267
  %v269 = vpop.f32.mrf.mxu0
  %v270 = vadd.f32 %v244, %v269
  %271 = vdwg.mxu0
  %vm272 = vcmask 31744
  %v273 = vsel %vm272, %v268, -inf
  %274 = vmax.xlane.f32.xlu0 %v273
  %v275 = vpop.xlane.xlu0 %274
  %v276 = vsel %vm272, %v270, -inf
  %277 = vmax.xlane.f32.xlu0 %v276
  %v278 = vpop.xlane.xlu0 %277
  %v279 = vsub.f32 %v268, %v275
  %v280 = vsub.f32 %v270, %v278
  %v281 = vmul.f32 %v279, 1.442695
  %v282 = vpow.pop %v281
  %v283 = vmul.f32 %v280, 1.442695
  %v284 = vpow.pop %v283
  %v285 = vsel %vm272, %v282, 0.0
  %286 = vadd.xlane.f32.xlu0 %v285
  %v287 = vpop.xlane.xlu0 %286
  %v288 = vsel %vm272, %v284, 0.0
  %289 = vadd.xlane.f32.xlu0 %v288
  %v290 = vpop.xlane.xlu0 %289
  %v291 = vrcp.pop %v287
  %v292 = vmul.f32 %v287, %v291
  %v293 = vsub.f32 1.0, %v292
  %v294 = vmul.f32 %v291, %v293
  %v295 = vadd.f32 %v291, %v294
  %vm296 = vweird.f32 %v287
  %vm297 = vweird.f32 %v291
  %vm298 = vmor %vm296, %vm297
  %v299 = vsel %vm298, %v291, %v295
  %v300 = vand.u32 2147483647, %v287
  %vm301 = vcmp.eq.f32.partialorder %v300, 8.507059e+37
  %v302 = vand.u32 %v287, 2147483648
  %v303 = vor.u32 1.1754944e-38, %v302
  %v304 = vsel %vm301, %v303, %v299
  %v305 = vmul.f32 %v282, %v304
  %v306 = vrcp.pop %v290
  %v307 = vmul.f32 %v290, %v306
  %v308 = vsub.f32 1.0, %v307
  %v309 = vmul.f32 %v306, %v308
  %v310 = vadd.f32 %v306, %v309
  %vm311 = vweird.f32 %v290
  %vm312 = vweird.f32 %v306
  %vm313 = vmor %vm311, %vm312
  %v314 = vsel %vm313, %v306, %v310
  %v315 = vand.u32 2147483647, %v290
  %vm316 = vcmp.eq.f32.partialorder %v315, 8.507059e+37
  %v317 = vand.u32 %v290, 2147483648
  %v318 = vor.u32 1.1754944e-38, %v317
  %v319 = vsel %vm316, %v318, %v314
  %v320 = vmul.f32 %v284, %v319
  %v321 = vld [vmem:[%s3] sm:$0xf]
  %v322 = vld [vmem:[%s3 + $0x4] sm:$0xf]
  %v323 = vld [vmem:[%s3 + $0x8] sm:$0xf]
  %v324 = vld [vmem:[%s3 + $0xc] sm:$0xf]
  %v325 = vld [vmem:[%s4] sm:$0x1]
  %v327 = vperm.slane %v325, 0
  %v333 = vunpack.c.l.b16 %v321
  %v334 = vunpack.c.l.b16 %v322
  %v335 = vunpack.c.l.b16 %v323
  %v336 = vunpack.c.l.b16 %v324
  %v337 = vpack.c.b16 %v334, %v333
  %v338 = vpack.c.b16 %v336, %v335
  %341 = vmatpush.bf16.msra.mxu0 0
  %342 = vmatpush.bf16.msra.mxu0 0
  %343 = vmatpush.bf16.msra.mxu0 0
  %344 = vmatpush.bf16.msra.mxu0 0
  %345 = vmatpush.bf16.msra.mxu0 0
  %346 = vmatpush.bf16.msra.mxu0 0
  %347 = vmatpush.bf16.msra.mxu0 %v338
  %348 = vmatpush.bf16.msra.mxu0 %v337
  %349 = vmatmul.bf16.gmra.mxu0 %v79
  %v350 = vpop.f32.mrf.mxu0
  %v351 = vadd.f32 %v327, %v350
  %v352 = vpop.f32.mrf.mxu0
  %v353 = vadd.f32 %v327, %v352
  %354 = vdwg.mxu0
  %v355 = vld [vmem:[%s5] sm:$0x1]
  %v357 = vperm.slane %v355, 0
  %v359 = vmul.f32 %v351, %v357
  %v360 = vmul.f32 %v353, %v357
  %vm361 = vcmask 130048
  %v362 = vsel %vm361, %v359, -inf
  %363 = vmax.xlane.f32.xlu0 %v362
  %v364 = vpop.xlane.xlu0 %363
  %v365 = vsel %vm361, %v360, -inf
  %366 = vmax.xlane.f32.xlu0 %v365
  %v367 = vpop.xlane.xlu0 %366
  %v368 = vsub.f32 %v359, %v364
  %v369 = vsub.f32 %v360, %v367
  %v370 = vmul.f32 %v368, 1.442695
  %v371 = vpow.pop %v370
  %v372 = vmul.f32 %v369, 1.442695
  %v373 = vpow.pop %v372
  %v374 = vld [vmem:[%s10] sm:$0xff]
  %v375 = vld [vmem:[%s10 + $0x8] sm:$0xff]
  %v377 = vsel %vm361, %v371, 0
  %v380 = vsel %vm361, %v373, 0
  %382 = vmatpush.msra.mxu0 0.0
  %383 = vmatpush.msra.mxu0 0.0
  %384 = vmatpush.msra.mxu0 0.0
  %385 = vmatpush.msra.mxu0 0.0
  %386 = vmatpush.msra.mxu0 0.0
  %387 = vmatpush.msra.mxu0 0.0
  %388 = vmatpush.msra.mxu0 0.0
  %389 = vmatpush.msra.mxu0 0.0
  %390 = vmatpush.msra.mxu0 0.0
  %391 = vmatpush.msra.mxu0 0.0
  %392 = vmatpush.msra.mxu0 0.0
  %393 = vmatpush.msra.mxu0 0.0
  %394 = vmatpush.msra.mxu0 0.0
  %395 = vmatpush.msra.mxu0 0.0
  %396 = vmatpush.msra.mxu0 %v375
  %397 = vmatpush.msra.mxu0 %v374
  %398 = vmatmul.f32.gmra.mxu0 %v377
  %v399 = vpop.f32.mrf.mxu0
  %v400 = vadd.f32 0.0, %v399
  %401 = vmatmul.f32.gmra.mxu0 %v380
  %v402 = vpop.f32.mrf.mxu0
  %v403 = vadd.f32 0.0, %v402
  %404 = vdwg.mxu0
  %v405 = vld [vmem:[%s11] sm:$0xf]
  %v407 = vsel %vm272, %v400, 0
  %v410 = vsel %vm272, %v403, 0
  %vm412 = vcmask 1043456
  %v414 = vsel %vm412, %v405, 0
  %416 = vmatpush.msra.mxu0 0.0
  %417 = vmatpush.msra.mxu0 0.0
  %418 = vmatpush.msra.mxu0 0.0
  %419 = vmatpush.msra.mxu0 0.0
  %420 = vmatpush.msra.mxu0 0.0
  %421 = vmatpush.msra.mxu0 0.0
  %422 = vmatpush.msra.mxu0 0.0
  %423 = vmatpush.msra.mxu0 0.0
  %424 = vmatpush.msra.mxu0 0.0
  %425 = vmatpush.msra.mxu0 0.0
  %426 = vmatpush.msra.mxu0 0.0
  %427 = vmatpush.msra.mxu0 0.0
  %428 = vmatpush.msra.mxu0 0.0
  %429 = vmatpush.msra.mxu0 0.0
  %430 = vmatpush.msra.mxu0 0.0
  %431 = vmatpush.msra.mxu0 %v414
  %432 = vmatmul.f32.gmra.mxu0 %v407
  %v433 = vpop.f32.mrf.mxu0
  %v434 = vadd.f32 0.0, %v433
  %435 = vmatmul.f32.gmra.mxu0 %v410
  %v436 = vpop.f32.mrf.mxu0
  %v437 = vadd.f32 0.0, %v436
  %438 = vdwg.mxu0
  %v439 = vrcp.pop %v434
  %v440 = vmul.f32 %v434, %v439
  %v441 = vsub.f32 1.0, %v440
  %v442 = vmul.f32 %v439, %v441
  %v443 = vadd.f32 %v439, %v442
  %vm444 = vweird.f32 %v434
  %vm445 = vweird.f32 %v439
  %vm446 = vmor %vm444, %vm445
  %v447 = vsel %vm446, %v439, %v443
  %v448 = vand.u32 2147483647, %v434
  %vm449 = vcmp.eq.f32.partialorder %v448, 8.507059e+37
  %v450 = vand.u32 %v434, 2147483648
  %v451 = vor.u32 1.1754944e-38, %v450
  %v452 = vsel %vm449, %v451, %v447
  %v453 = vrcp.pop %v437
  %v454 = vmul.f32 %v437, %v453
  %v455 = vsub.f32 1.0, %v454
  %v456 = vmul.f32 %v453, %v455
  %v457 = vadd.f32 %v453, %v456
  %vm458 = vweird.f32 %v437
  %vm459 = vweird.f32 %v453
  %vm460 = vmor %vm458, %vm459
  %v461 = vsel %vm460, %v453, %v457
  %v462 = vand.u32 2147483647, %v437
  %vm463 = vcmp.eq.f32.partialorder %v462, 8.507059e+37
  %v464 = vand.u32 %v437, 2147483648
  %v465 = vor.u32 1.1754944e-38, %v464
  %v466 = vsel %vm463, %v465, %v461
  %v467 = vmul.f32 %v371, %v452
  %v468 = vmul.f32 %v373, %v466
  %470 = vset.pattern.permute.xlu0 0
  %471 = vperm.xlu0 %470, %v222
  %v472 = vpop.permute.xlu0 %471
  %475 = vset.pattern.permute.xlu0 0
  %476 = vperm.xlu0 %475, %v237
  %v477 = vpop.permute.xlu0 %476
  %v479 = vmul.f32 %v467, %v472
  %v480 = vmul.f32 %v468, %v477
  %v481 = vsub.f32 1.0, %v222
  %v482 = vsub.f32 1.0, %v237
  %v483 = vmul.f32 %v481, 0.25
  %v484 = vmul.f32 %v482, 0.25
  %486 = vset.pattern.permute.xlu0 0
  %487 = vperm.xlu0 %486, %v483
  %v488 = vpop.permute.xlu0 %487
  %491 = vset.pattern.permute.xlu0 0
  %492 = vperm.xlu0 %491, %v484
  %v493 = vpop.permute.xlu0 %492
  %v495 = vadd.f32 %v479, %v488
  %v496 = vadd.f32 %v480, %v493
  %v497 = vld [vmem:[%s12] sm:$0xff]
  %v498 = vld [vmem:[%s12 + $0x8] sm:$0xff]
  %v499 = vld [vmem:[%s13] sm:$0xf]
  %v501 = vsel %vm272, %v305, 0
  %v504 = vsel %vm272, %v320, 0
  %v507 = vsel %vm412, %v499, 0
  %509 = vmatpush.msra.mxu0 0.0
  %510 = vmatpush.msra.mxu0 0.0
  %511 = vmatpush.msra.mxu0 0.0
  %512 = vmatpush.msra.mxu0 0.0
  %513 = vmatpush.msra.mxu0 0.0
  %514 = vmatpush.msra.mxu0 0.0
  %515 = vmatpush.msra.mxu0 0.0
  %516 = vmatpush.msra.mxu0 0.0
  %517 = vmatpush.msra.mxu0 0.0
  %518 = vmatpush.msra.mxu0 0.0
  %519 = vmatpush.msra.mxu0 0.0
  %520 = vmatpush.msra.mxu0 0.0
  %521 = vmatpush.msra.mxu0 0.0
  %522 = vmatpush.msra.mxu0 0.0
  %523 = vmatpush.msra.mxu0 0.0
  %524 = vmatpush.msra.mxu0 %v507
  %525 = vmatmul.f32.gmra.mxu0 %v501
  %v526 = vpop.f32.mrf.mxu0
  %v527 = vadd.f32 0.0, %v526
  %528 = vmatmul.f32.gmra.mxu0 %v504
  %v529 = vpop.f32.mrf.mxu0
  %v530 = vadd.f32 0.0, %v529
  %531 = vdwg.mxu0
  %v533 = vsel %vm361, %v495, 0
  %v536 = vsel %vm361, %v496, 0
  %538 = vmatpush.msra.mxu0 0.0
  %539 = vmatpush.msra.mxu0 0.0
  %540 = vmatpush.msra.mxu0 0.0
  %541 = vmatpush.msra.mxu0 0.0
  %542 = vmatpush.msra.mxu0 0.0
  %543 = vmatpush.msra.mxu0 0.0
  %544 = vmatpush.msra.mxu0 0.0
  %545 = vmatpush.msra.mxu0 0.0
  %546 = vmatpush.msra.mxu0 0.0
  %547 = vmatpush.msra.mxu0 0.0
  %548 = vmatpush.msra.mxu0 0.0
  %549 = vmatpush.msra.mxu0 0.0
  %550 = vmatpush.msra.mxu0 0.0
  %551 = vmatpush.msra.mxu0 0.0
  %552 = vmatpush.msra.mxu0 %v498
  %553 = vmatpush.msra.mxu0 %v497
  %554 = vmatmul.f32.gmra.mxu0 %v533
  %v555 = vpop.f32.mrf.mxu0
  %v556 = vadd.f32 %v527, %v555
  %557 = vmatmul.f32.gmra.mxu0 %v536
  %v558 = vpop.f32.mrf.mxu0
  %v559 = vadd.f32 %v530, %v558
  %560 = vdwg.mxu0
  %561 = vst [vmem:[%s14] sm:$0xff] %v556
  %562 = vst [vmem:[%s14 + $0x8] sm:$0xff] %v559
  // Predicated region
  $region58: #{self_refining_moe_forward.2} parent=0 // pred_check
    _
  $region59: #{self_refining_moe_forward.2} parent=0 // pred_check_branch
    %564 = sbr.rel (0) target = $region61
  $region60: #{self_refining_moe_forward.2} parent=0 // pred_region
    _
  $region61: #{self_refining_moe_forward.2} parent=0 // pred_fallthru
    _
  // Predicated region
  $region62: #{self_refining_moe_forward.2} parent=0 // pred_check
    _
  $region63: #{self_refining_moe_forward.2} parent=0 // pred_check_branch
    %566 = sbr.rel (0) target = $region65
  $region64: #{self_refining_moe_forward.2} parent=0 // pred_region
    _
  $region65: #{self_refining_moe_forward.2} parent=0 // pred_fallthru
    _

// kernel: self_refining_moe_forward.3
$region0: #{self_refining_moe_forward.3}
  #allocation0 [shape = 'u32[]', space=smem, size = 0x4, offset = 0x4, fixed_abs, tag = 'smem constant byte address 0x4 - core index']
  #allocation1 [shape = 'u32[72,128]{1,0:T(1,128)}', space=vmem, size = 0x9000, scoped, tag = 'internal scratch']
  %s0 = inlined_call_operand.vmem [shape: bf16[16,32], index: 0, kind: input, shape index: {}]
  %s1 = inlined_call_operand.vmem [shape: bf16[32,1024], index: 1, kind: input, shape index: {}]
  %s2 = inlined_call_operand.vmem [shape: f32[1,1024], index: 2, kind: input, shape index: {}]
  %s3 = inlined_call_operand.vmem [shape: bf16[1024,32], index: 3, kind: input, shape index: {}]
  %s4 = inlined_call_operand.vmem [shape: bf16[16,32], index: 4, kind: input, shape index: {}]
  %s5 = inlined_call_operand.vmem [shape: f32[16,16], index: 5, kind: input, shape index: {}]
  %s6 = inlined_call_operand.vmem [shape: bf16[16,1024], index: 6, kind: input, shape index: {}]
  %s7 = inlined_call_operand.hbm [shape: f32[16,32], index: 7, kind: output, shape index: {}]
  %s8 = sld [smem:[#allocation0]]
  $region46: #{self_refining_moe_forward.3} parent=0
    _
  %s10 = ssub.s32 1, %s8
  %s11 = scalar_select 0, %s10, %s8
  $region1: #{self_refining_moe_forward.3} parent=0
    #allocation2 [shape = 'u8[8192]{0}', space=vmem, size = 0x2000, scoped, tag = 'output window, operand 0, single buffered']
    #allocation3 [shape = 's32[1]{0}', space=sflag, size = 0x4, scoped, tag = 'scoped memory for self_refining_moe_forward.3']
    %12 = vsyncpa [#allocation3], 0
    // Predicated region
    $region2: #{self_refining_moe_forward.3} parent=1 // pred_check
      _
    $region3: #{self_refining_moe_forward.3} parent=1 // pred_check_branch
      %14 = sbr.rel (0) target = $region5
    $region4: #{self_refining_moe_forward.3} parent=1 // pred_region
      _
    $region5: #{self_refining_moe_forward.3} parent=1 // pred_fallthru
      _
    // Predicated region
    $region6: #{self_refining_moe_forward.3} parent=1 // pred_check
      _
    $region7: #{self_refining_moe_forward.3} parent=1 // pred_check_branch
      %16 = sbr.rel (0) target = $region9
    $region8: #{self_refining_moe_forward.3} parent=1 // pred_region
      %s17 = sadd.s32 0, 0
      %s18 = smul.u32 8, %s17
      %p19 = scmp.lt.s32.totalorder %s18, 7
      %s20 = scalar_select %p19, %s18, 7
      %s21 = smul.addr %s20, 4
      %s22 = scalar_lea.vmem %s1, %s21
      %s23 = sadd.s32 0, 0
      %s24 = smul.u32 8, %s23
    $region9: #{self_refining_moe_forward.3} parent=1 // pred_fallthru
      _
    // Predicated region
    $region10: #{self_refining_moe_forward.3} parent=1 // pred_check
      _
    $region11: #{self_refining_moe_forward.3} parent=1 // pred_check_branch
      %26 = sbr.rel (0) target = $region13
    $region12: #{self_refining_moe_forward.3} parent=1 // pred_region
      %s27 = sadd.s32 0, 0
      %s28 = smul.u32 8, %s27
      %p29 = scmp.lt.s32.totalorder %s28, 7
      %s30 = scalar_select %p29, %s28, 7
      %s31 = scalar_lea.vmem %s2, %s30
      %s32 = sadd.s32 0, 0
      %s33 = smul.u32 8, %s32
    $region13: #{self_refining_moe_forward.3} parent=1 // pred_fallthru
      _
    // Predicated region
    $region14: #{self_refining_moe_forward.3} parent=1 // pred_check
      _
    $region15: #{self_refining_moe_forward.3} parent=1 // pred_check_branch
      %35 = sbr.rel (0) target = $region17
    $region16: #{self_refining_moe_forward.3} parent=1 // pred_region
      %s36 = sadd.s32 0, 0
      %s37 = smul.u32 128, %s36
      %p38 = scmp.lt.s32.totalorder %s37, 127
      %s39 = scalar_select %p38, %s37, 127
      %s40 = smul.addr %s39, 4
      %s41 = scalar_lea.vmem %s3, %s40
      %s42 = sadd.s32 0, 0
      %s43 = smul.u32 128, %s42
    $region17: #{self_refining_moe_forward.3} parent=1 // pred_fallthru
      _
    // Predicated region
    $region18: #{self_refining_moe_forward.3} parent=1 // pred_check
      _
    $region19: #{self_refining_moe_forward.3} parent=1 // pred_check_branch
      %45 = sbr.rel (0) target = $region21
    $region20: #{self_refining_moe_forward.3} parent=1 // pred_region
      _
    $region21: #{self_refining_moe_forward.3} parent=1 // pred_fallthru
      _
    // Predicated region
    $region22: #{self_refining_moe_forward.3} parent=1 // pred_check
      _
    $region23: #{self_refining_moe_forward.3} parent=1 // pred_check_branch
      %47 = sbr.rel (0) target = $region25
    $region24: #{self_refining_moe_forward.3} parent=1 // pred_region
      _
    $region25: #{self_refining_moe_forward.3} parent=1 // pred_fallthru
      _
    // Predicated region
    $region26: #{self_refining_moe_forward.3} parent=1 // pred_check
      _
    $region27: #{self_refining_moe_forward.3} parent=1 // pred_check_branch
      %49 = sbr.rel (0) target = $region29
    $region28: #{self_refining_moe_forward.3} parent=1 // pred_region
      _
    $region29: #{self_refining_moe_forward.3} parent=1 // pred_fallthru
      _
    %s50 = sadd.s32 0, 0
    %s51 = smul.u32 8, %s50
    %p52 = scmp.lt.s32.totalorder %s51, 7
    %s53 = scalar_select %p52, %s51, 7
    %s54 = smul.addr %s53, 4
    %s55 = scalar_lea.vmem %s1, %s54
    %s56 = sadd.s32 0, 0
    %s57 = smul.u32 8, %s56
    %p58 = scmp.lt.s32.totalorder %s57, 7
    %s59 = scalar_select %p58, %s57, 7
    %s60 = scalar_lea.vmem %s2, %s59
    %s61 = sadd.s32 0, 0
    %s62 = smul.u32 128, %s61
    %p63 = scmp.lt.s32.totalorder %s62, 127
    %s64 = scalar_select %p63, %s62, 127
    %s65 = smul.addr %s64, 4
    %s66 = scalar_lea.vmem %s3, %s65
    %s67 = sadd.s32 0, 0
    %s68 = smul.u32 8, %s67
    %p69 = scmp.lt.s32.totalorder %s68, 7
    %s70 = scalar_select %p69, %s68, 7
    %s71 = smul.addr %s70, 4
    %s72 = scalar_lea.vmem %s1, %s71
    %s73 = sadd.s32 0, 0
    %s74 = smul.u32 8, %s73
    %s75 = sadd.s32 0, 0
    %s76 = smul.u32 8, %s75
    %p77 = scmp.lt.s32.totalorder %s76, 7
    %s78 = scalar_select %p77, %s76, 7
    %s79 = scalar_lea.vmem %s2, %s78
    %s80 = sadd.s32 0, 0
    %s81 = smul.u32 8, %s80
    %s82 = sadd.s32 0, 0
    %s83 = smul.u32 128, %s82
    %p84 = scmp.lt.s32.totalorder %s83, 127
    %s85 = scalar_select %p84, %s83, 127
    %s86 = smul.addr %s85, 4
    %s87 = scalar_lea.vmem %s3, %s86
    %s88 = sadd.s32 0, 0
    %s89 = smul.u32 128, %s88
    %p91 = scmp.eq.s32.totalorder 0, 0
    %p92 = scmp.eq.s32.totalorder 0, 0
    %p93 = pnand %p91, %p92
    %p94 = pneg %p93
    // Predicated region
    $region30: #{self_refining_moe_forward.3} parent=1 // pred_check
      _
    $region31: #{self_refining_moe_forward.3} parent=1 // pred_check_branch
      %96 = sbr.rel (%p93) target = $region33
    $region32: #{self_refining_moe_forward.3} parent=1 // pred_region
      %vm97 = vcmask 261120
      %98 = vst.msk [vmem:[#allocation2] sm:$0xff] %vm97, 0.0
      %99 = vst.msk [vmem:[#allocation2 + $0x8] sm:$0xff] %vm97, 0.0
    $region33: #{self_refining_moe_forward.3} parent=1 // pred_fallthru
      _
    %v100 = vld [vmem:[%s0] sm:$0xf]
    %v101 = vld [vmem:[%s0 + $0x4] sm:$0xf]
    %v102 = vld [vmem:[%s72] sm:$0xff]
    %v103 = vld [vmem:[%s72 + $0x8] sm:$0xff]
    %v104 = vld [vmem:[%s72 + $0x10] sm:$0xff]
    %v105 = vld [vmem:[%s72 + $0x18] sm:$0xff]
    %v106 = vld [vmem:[%s72 + $0x20] sm:$0xff]
    %v107 = vld [vmem:[%s72 + $0x28] sm:$0xff]
    %v108 = vld [vmem:[%s72 + $0x30] sm:$0xff]
    %v109 = vld [vmem:[%s72 + $0x38] sm:$0xff]
    %v110 = vld [vmem:[%s72 + $0x40] sm:$0xff]
    %v111 = vld [vmem:[%s72 + $0x48] sm:$0xff]
    %v112 = vld [vmem:[%s72 + $0x50] sm:$0xff]
    %v113 = vld [vmem:[%s72 + $0x58] sm:$0xff]
    %v114 = vld [vmem:[%s72 + $0x60] sm:$0xff]
    %v115 = vld [vmem:[%s72 + $0x68] sm:$0xff]
    %v116 = vld [vmem:[%s72 + $0x70] sm:$0xff]
    %v117 = vld [vmem:[%s72 + $0x78] sm:$0xff]
    %v118 = vld [vmem:[%s79] sm:$0xff]
    %v120 = vperm.slane %v118, 0
    %v121 = vperm.slane %v118, 1
    %v122 = vperm.slane %v118, 2
    %v123 = vperm.slane %v118, 3
    %v124 = vperm.slane %v118, 4
    %v125 = vperm.slane %v118, 5
    %v126 = vperm.slane %v118, 6
    %v127 = vperm.slane %v118, 7
    %v138 = vunpack.c.l.b16 %v100
    %v139 = vunpack.c.l.b16 %v101
    %v140 = vpack.c.b16 %v139, %v138
    %v157 = vunpack.c.l.b16 %v102
    %v158 = vunpack.c.h.b16 %v102
    %v159 = vunpack.c.l.b16 %v103
    %v160 = vunpack.c.h.b16 %v103
    %v161 = vunpack.c.l.b16 %v104
    %v162 = vunpack.c.h.b16 %v104
    %v163 = vunpack.c.l.b16 %v105
    %v164 = vunpack.c.h.b16 %v105
    %v165 = vunpack.c.l.b16 %v106
    %v166 = vunpack.c.h.b16 %v106
    %v167 = vunpack.c.l.b16 %v107
    %v168 = vunpack.c.h.b16 %v107
    %v169 = vunpack.c.l.b16 %v108
    %v170 = vunpack.c.h.b16 %v108
    %v171 = vunpack.c.l.b16 %v109
    %v172 = vunpack.c.h.b16 %v109
    %v173 = vunpack.c.l.b16 %v110
    %v174 = vunpack.c.h.b16 %v110
    %v175 = vunpack.c.l.b16 %v111
    %v176 = vunpack.c.h.b16 %v111
    %v177 = vunpack.c.l.b16 %v112
    %v178 = vunpack.c.h.b16 %v112
    %v179 = vunpack.c.l.b16 %v113
    %v180 = vunpack.c.h.b16 %v113
    %v181 = vunpack.c.l.b16 %v114
    %v182 = vunpack.c.h.b16 %v114
    %v183 = vunpack.c.l.b16 %v115
    %v184 = vunpack.c.h.b16 %v115
    %v185 = vunpack.c.l.b16 %v116
    %v186 = vunpack.c.h.b16 %v116
    %v187 = vunpack.c.l.b16 %v117
    %v188 = vunpack.c.h.b16 %v117
    %v189 = vpack.c.b16 %v165, %v157
    %v190 = vpack.c.b16 %v166, %v158
    %v191 = vpack.c.b16 %v167, %v159
    %v192 = vpack.c.b16 %v168, %v160
    %v193 = vpack.c.b16 %v169, %v161
    %v194 = vpack.c.b16 %v170, %v162
    %v195 = vpack.c.b16 %v171, %v163
    %v196 = vpack.c.b16 %v172, %v164
    %v197 = vpack.c.b16 %v181, %v173
    %v198 = vpack.c.b16 %v182, %v174
    %v199 = vpack.c.b16 %v183, %v175
    %v200 = vpack.c.b16 %v184, %v176
    %v201 = vpack.c.b16 %v185, %v177
    %v202 = vpack.c.b16 %v186, %v178
    %v203 = vpack.c.b16 %v187, %v179
    %v204 = vpack.c.b16 %v188, %v180
    %vm221 = vcmask 261120
    %v223 = vsel %vm221, %v140, 0
    %225 = vmatpush.bf16.msra.mxu0 0
    %226 = vmatpush.bf16.msra.mxu0 0
    %227 = vmatpush.bf16.msra.mxu0 0
    %228 = vmatpush.bf16.msra.mxu0 0
    %229 = vmatpush.bf16.msra.mxu0 0
    %230 = vmatpush.bf16.msra.mxu0 0
    %231 = vmatpush.bf16.msra.mxu0 %v197
    %232 = vmatpush.bf16.msra.mxu0 %v189
    %233 = vmatmul.bf16.gmra.mxu0 %v223
    %v234 = vpop.f32.mrf.mxu0
    %v235 = vadd.f32 %v120, %v234
    %v236 = vpop.f32.mrf.mxu0
    %v237 = vadd.f32 %v120, %v236
    %238 = vdwg.mxu0
    %239 = vmatpush.bf16.msra.mxu0 0
    %240 = vmatpush.bf16.msra.mxu0 0
    %241 = vmatpush.bf16.msra.mxu0 0
    %242 = vmatpush.bf16.msra.mxu0 0
    %243 = vmatpush.bf16.msra.mxu0 0
    %244 = vmatpush.bf16.msra.mxu0 0
    %245 = vmatpush.bf16.msra.mxu0 %v198
    %246 = vmatpush.bf16.msra.mxu0 %v190
    %247 = vmatmul.bf16.gmra.mxu0 %v223
    %v248 = vpop.f32.mrf.mxu0
    %v249 = vadd.f32 %v121, %v248
    %v250 = vpop.f32.mrf.mxu0
    %v251 = vadd.f32 %v121, %v250
    %252 = vdwg.mxu0
    %253 = vmatpush.bf16.msra.mxu0 0
    %254 = vmatpush.bf16.msra.mxu0 0
    %255 = vmatpush.bf16.msra.mxu0 0
    %256 = vmatpush.bf16.msra.mxu0 0
    %257 = vmatpush.bf16.msra.mxu0 0
    %258 = vmatpush.bf16.msra.mxu0 0
    %259 = vmatpush.bf16.msra.mxu0 %v199
    %260 = vmatpush.bf16.msra.mxu0 %v191
    %261 = vmatmul.bf16.gmra.mxu0 %v223
    %v262 = vpop.f32.mrf.mxu0
    %v263 = vadd.f32 %v122, %v262
    %v264 = vpop.f32.mrf.mxu0
    %v265 = vadd.f32 %v122, %v264
    %266 = vdwg.mxu0
    %267 = vmatpush.bf16.msra.mxu0 0
    %268 = vmatpush.bf16.msra.mxu0 0
    %269 = vmatpush.bf16.msra.mxu0 0
    %270 = vmatpush.bf16.msra.mxu0 0
    %271 = vmatpush.bf16.msra.mxu0 0
    %272 = vmatpush.bf16.msra.mxu0 0
    %273 = vmatpush.bf16.msra.mxu0 %v200
    %274 = vmatpush.bf16.msra.mxu0 %v192
    %275 = vmatmul.bf16.gmra.mxu0 %v223
    %v276 = vpop.f32.mrf.mxu0
    %v277 = vadd.f32 %v123, %v276
    %v278 = vpop.f32.mrf.mxu0
    %v279 = vadd.f32 %v123, %v278
    %280 = vdwg.mxu0
    %281 = vmatpush.bf16.msra.mxu0 0
    %282 = vmatpush.bf16.msra.mxu0 0
    %283 = vmatpush.bf16.msra.mxu0 0
    %284 = vmatpush.bf16.msra.mxu0 0
    %285 = vmatpush.bf16.msra.mxu0 0
    %286 = vmatpush.bf16.msra.mxu0 0
    %287 = vmatpush.bf16.msra.mxu0 %v201
    %288 = vmatpush.bf16.msra.mxu0 %v193
    %289 = vmatmul.bf16.gmra.mxu0 %v223
    %v290 = vpop.f32.mrf.mxu0
    %v291 = vadd.f32 %v124, %v290
    %v292 = vpop.f32.mrf.mxu0
    %v293 = vadd.f32 %v124, %v292
    %294 = vdwg.mxu0
    %295 = vmatpush.bf16.msra.mxu0 0
    %296 = vmatpush.bf16.msra.mxu0 0
    %297 = vmatpush.bf16.msra.mxu0 0
    %298 = vmatpush.bf16.msra.mxu0 0
    %299 = vmatpush.bf16.msra.mxu0 0
    %300 = vmatpush.bf16.msra.mxu0 0
    %301 = vmatpush.bf16.msra.mxu0 %v202
    %302 = vmatpush.bf16.msra.mxu0 %v194
    %303 = vmatmul.bf16.gmra.mxu0 %v223
    %v304 = vpop.f32.mrf.mxu0
    %v305 = vadd.f32 %v125, %v304
    %v306 = vpop.f32.mrf.mxu0
    %v307 = vadd.f32 %v125, %v306
    %308 = vdwg.mxu0
    %309 = vmatpush.bf16.msra.mxu0 0
    %310 = vmatpush.bf16.msra.mxu0 0
    %311 = vmatpush.bf16.msra.mxu0 0
    %312 = vmatpush.bf16.msra.mxu0 0
    %313 = vmatpush.bf16.msra.mxu0 0
    %314 = vmatpush.bf16.msra.mxu0 0
    %315 = vmatpush.bf16.msra.mxu0 %v203
    %316 = vmatpush.bf16.msra.mxu0 %v195
    %317 = vmatmul.bf16.gmra.mxu0 %v223
    %v318 = vpop.f32.mrf.mxu0
    %v319 = vadd.f32 %v126, %v318
    %v320 = vpop.f32.mrf.mxu0
    %v321 = vadd.f32 %v126, %v320
    %322 = vdwg.mxu0
    %323 = vmatpush.bf16.msra.mxu0 0
    %324 = vmatpush.bf16.msra.mxu0 0
    %325 = vmatpush.bf16.msra.mxu0 0
    %326 = vmatpush.bf16.msra.mxu0 0
    %327 = vmatpush.bf16.msra.mxu0 0
    %328 = vmatpush.bf16.msra.mxu0 0
    %329 = vmatpush.bf16.msra.mxu0 %v204
    %330 = vmatpush.bf16.msra.mxu0 %v196
    %331 = vmatmul.bf16.gmra.mxu0 %v223
    %v332 = vpop.f32.mrf.mxu0
    %v333 = vadd.f32 %v127, %v332
    %v334 = vpop.f32.mrf.mxu0
    %v335 = vadd.f32 %v127, %v334
    %336 = vdwg.mxu0
    %v337 = vmul.f32 %v235, 0.5
    %v338 = vmul.f32 %v249, 0.5
    %v339 = vmul.f32 %v263, 0.5
    %v340 = vmul.f32 %v277, 0.5
    %v341 = vmul.f32 %v291, 0.5
    %v342 = vmul.f32 %v305, 0.5
    %v343 = vmul.f32 %v319, 0.5
    %v344 = vmul.f32 %v333, 0.5
    %v345 = vmul.f32 %v237, 0.5
    %v346 = vmul.f32 %v251, 0.5
    %v347 = vmul.f32 %v265, 0.5
    %v348 = vmul.f32 %v279, 0.5
    %v349 = vmul.f32 %v293, 0.5
    %v350 = vmul.f32 %v307, 0.5
    %v351 = vmul.f32 %v321, 0.5
    %v352 = vmul.f32 %v335, 0.5
    %v353 = vmul.f32 %v235, 0.70710677
    %v354 = vmul.f32 %v249, 0.70710677
    %v355 = vmul.f32 %v263, 0.70710677
    %v356 = vmul.f32 %v277, 0.70710677
    %v357 = vmul.f32 %v291, 0.70710677
    %v358 = vmul.f32 %v305, 0.70710677
    %v359 = vmul.f32 %v319, 0.70710677
    %v360 = vmul.f32 %v333, 0.70710677
    %v361 = vmul.f32 %v237, 0.70710677
    %v362 = vmul.f32 %v251, 0.70710677
    %v363 = vmul.f32 %v265, 0.70710677
    %v364 = vmul.f32 %v279, 0.70710677
    %v365 = vmul.f32 %v293, 0.70710677
    %v366 = vmul.f32 %v307, 0.70710677
    %v367 = vmul.f32 %v321, 0.70710677
    %v368 = vmul.f32 %v335, 0.70710677
    %v369 = vmax.f32 %v353, -4.0
    %v370 = vmax.f32 %v354, -4.0
    %v371 = vmax.f32 %v355, -4.0
    %v372 = vmax.f32 %v356, -4.0
    %v373 = vmax.f32 %v357, -4.0
    %v374 = vmax.f32 %v358, -4.0
    %v375 = vmax.f32 %v359, -4.0
    %v376 = vmax.f32 %v360, -4.0
    %v377 = vmax.f32 %v361, -4.0
    %v378 = vmax.f32 %v362, -4.0
    %v379 = vmax.f32 %v363, -4.0
    %v380 = vmax.f32 %v364, -4.0
    %v381 = vmax.f32 %v365, -4.0
    %v382 = vmax.f32 %v366, -4.0
    %v383 = vmax.f32 %v367, -4.0
    %v384 = vmax.f32 %v368, -4.0
    %v385 = vmin.f32 %v369, 4.0
    %v386 = vmin.f32 %v370, 4.0
    %v387 = vmin.f32 %v371, 4.0
    %v388 = vmin.f32 %v372, 4.0
    %v389 = vmin.f32 %v373, 4.0
    %v390 = vmin.f32 %v374, 4.0
    %v391 = vmin.f32 %v375, 4.0
    %v392 = vmin.f32 %v376, 4.0
    %v393 = vmin.f32 %v377, 4.0
    %v394 = vmin.f32 %v378, 4.0
    %v395 = vmin.f32 %v379, 4.0
    %v396 = vmin.f32 %v380, 4.0
    %v397 = vmin.f32 %v381, 4.0
    %v398 = vmin.f32 %v382, 4.0
    %v399 = vmin.f32 %v383, 4.0
    %v400 = vmin.f32 %v384, 4.0
    %v401 = vmul.f32 %v385, %v385
    %v402 = vmul.f32 %v386, %v386
    %v403 = vmul.f32 %v387, %v387
    %v404 = vmul.f32 %v388, %v388
    %v405 = vmul.f32 %v389, %v389
    %v406 = vmul.f32 %v390, %v390
    %v407 = vmul.f32 %v391, %v391
    %v408 = vmul.f32 %v392, %v392
    %v409 = vmul.f32 %v393, %v393
    %v410 = vmul.f32 %v394, %v394
    %v411 = vmul.f32 %v395, %v395
    %v412 = vmul.f32 %v396, %v396
    %v413 = vmul.f32 %v397, %v397
    %v414 = vmul.f32 %v398, %v398
    %v415 = vmul.f32 %v399, %v399
    %v416 = vmul.f32 %v400, %v400
    %v417 = vmul.f32 %v401, -2.7261424e-10
    %v418 = vmul.f32 %v402, -2.7261424e-10
    %v419 = vmul.f32 %v403, -2.7261424e-10
    %v420 = vmul.f32 %v404, -2.7261424e-10
    %v421 = vmul.f32 %v405, -2.7261424e-10
    %v422 = vmul.f32 %v406, -2.7261424e-10
    %v423 = vmul.f32 %v407, -2.7261424e-10
    %v424 = vmul.f32 %v408, -2.7261424e-10
    %v425 = vmul.f32 %v409, -2.7261424e-10
    %v426 = vmul.f32 %v410, -2.7261424e-10
    %v427 = vmul.f32 %v411, -2.7261424e-10
    %v428 = vmul.f32 %v412, -2.7261424e-10
    %v429 = vmul.f32 %v413, -2.7261424e-10
    %v430 = vmul.f32 %v414, -2.7261424e-10
    %v431 = vmul.f32 %v415, -2.7261424e-10
    %v432 = vmul.f32 %v416, -2.7261424e-10
    %v433 = vadd.f32 %v417, 2.7706815e-08
    %v434 = vadd.f32 %v418, 2.7706815e-08
    %v435 = vadd.f32 %v419, 2.7706815e-08
    %v436 = vadd.f32 %v420, 2.7706815e-08
    %v437 = vadd.f32 %v421, 2.7706815e-08
    %v438 = vadd.f32 %v422, 2.7706815e-08
    %v439 = vadd.f32 %v423, 2.7706815e-08
    %v440 = vadd.f32 %v424, 2.7706815e-08
    %v441 = vadd.f32 %v425, 2.7706815e-08
    %v442 = vadd.f32 %v426, 2.7706815e-08
    %v443 = vadd.f32 %v427, 2.7706815e-08
    %v444 = vadd.f32 %v428, 2.7706815e-08
    %v445 = vadd.f32 %v429, 2.7706815e-08
    %v446 = vadd.f32 %v430, 2.7706815e-08
    %v447 = vadd.f32 %v431, 2.7706815e-08
    %v448 = vadd.f32 %v432, 2.7706815e-08
    %v449 = vmul.f32 %v433, %v401
    %v450 = vmul.f32 %v434, %v402
    %v451 = vmul.f32 %v435, %v403
    %v452 = vmul.f32 %v436, %v404
    %v453 = vmul.f32 %v437, %v405
    %v454 = vmul.f32 %v438, %v406
    %v455 = vmul.f32 %v439, %v407
    %v456 = vmul.f32 %v440, %v408
    %v457 = vmul.f32 %v441, %v409
    %v458 = vmul.f32 %v442, %v410
    %v459 = vmul.f32 %v443, %v411
    %v460 = vmul.f32 %v444, %v412
    %v461 = vmul.f32 %v445, %v413
    %v462 = vmul.f32 %v446, %v414
    %v463 = vmul.f32 %v447, %v415
    %v464 = vmul.f32 %v448, %v416
    %v465 = vadd.f32 %v449, -2.101024e-06
    %v466 = vadd.f32 %v450, -2.101024e-06
    %v467 = vadd.f32 %v451, -2.101024e-06
    %v468 = vadd.f32 %v452, -2.101024e-06
    %v469 = vadd.f32 %v453, -2.101024e-06
    %v470 = vadd.f32 %v454, -2.101024e-06
    %v471 = vadd.f32 %v455, -2.101024e-06
    %v472 = vadd.f32 %v456, -2.101024e-06
    %v473 = vadd.f32 %v457, -2.101024e-06
    %v474 = vadd.f32 %v458, -2.101024e-06
    %v475 = vadd.f32 %v459, -2.101024e-06
    %v476 = vadd.f32 %v460, -2.101024e-06
    %v477 = vadd.f32 %v461, -2.101024e-06
    %v478 = vadd.f32 %v462, -2.101024e-06
    %v479 = vadd.f32 %v463, -2.101024e-06
    %v480 = vadd.f32 %v464, -2.101024e-06
    %v481 = vmul.f32 %v465, %v401
    %v482 = vmul.f32 %v466, %v402
    %v483 = vmul.f32 %v467, %v403
    %v484 = vmul.f32 %v468, %v404
    %v485 = vmul.f32 %v469, %v405
    %v486 = vmul.f32 %v470, %v406
    %v487 = vmul.f32 %v471, %v407
    %v488 = vmul.f32 %v472, %v408
    %v489 = vmul.f32 %v473, %v409
    %v490 = vmul.f32 %v474, %v410
    %v491 = vmul.f32 %v475, %v411
    %v492 = vmul.f32 %v476, %v412
    %v493 = vmul.f32 %v477, %v413
    %v494 = vmul.f32 %v478, %v414
    %v495 = vmul.f32 %v479, %v415
    %v496 = vmul.f32 %v480, %v416
    %v497 = vadd.f32 %v481, -5.6925062e-05
    %v498 = vadd.f32 %v482, -5.6925062e-05
    %v499 = vadd.f32 %v483, -5.6925062e-05
    %v500 = vadd.f32 %v484, -5.6925062e-05
    %v501 = vadd.f32 %v485, -5.6925062e-05
    %v502 = vadd.f32 %v486, -5.6925062e-05
    %v503 = vadd.f32 %v487, -5.6925062e-05
    %v504 = vadd.f32 %v488, -5.6925062e-05
    %v505 = vadd.f32 %v489, -5.6925062e-05
    %v506 = vadd.f32 %v490, -5.6925062e-05
    %v507 = vadd.f32 %v491, -5.6925062e-05
    %v508 = vadd.f32 %v492, -5.6925062e-05
    %v509 = vadd.f32 %v493, -5.6925062e-05
    %v510 = vadd.f32 %v494, -5.6925062e-05
    %v511 = vadd.f32 %v495, -5.6925062e-05
    %v512 = vadd.f32 %v496, -5.6925062e-05
    %v513 = vmul.f32 %v497, %v401
    %v514 = vmul.f32 %v498, %v402
    %v515 = vmul.f32 %v499, %v403
    %v516 = vmul.f32 %v500, %v404
    %v517 = vmul.f32 %v501, %v405
    %v518 = vmul.f32 %v502, %v406
    %v519 = vmul.f32 %v503, %v407
    %v520 = vmul.f32 %v504, %v408
    %v521 = vmul.f32 %v505, %v409
    %v522 = vmul.f32 %v506, %v410
    %v523 = vmul.f32 %v507, %v411
    %v524 = vmul.f32 %v508, %v412
    %v525 = vmul.f32 %v509, %v413
    %v526 = vmul.f32 %v510, %v414
    %v527 = vmul.f32 %v511, %v415
    %v528 = vmul.f32 %v512, %v416
    %v529 = vadd.f32 %v513, -0.00073499064
    %v530 = vadd.f32 %v514, -0.00073499064
    %v531 = vadd.f32 %v515, -0.00073499064
    %v532 = vadd.f32 %v516, -0.00073499064
    %v533 = vadd.f32 %v517, -0.00073499064
    %v534 = vadd.f32 %v518, -0.00073499064
    %v535 = vadd.f32 %v519, -0.00073499064
    %v536 = vadd.f32 %v520, -0.00073499064
    %v537 = vadd.f32 %v521, -0.00073499064
    %v538 = vadd.f32 %v522, -0.00073499064
    %v539 = vadd.f32 %v523, -0.00073499064
    %v540 = vadd.f32 %v524, -0.00073499064
    %v541 = vadd.f32 %v525, -0.00073499064
    %v542 = vadd.f32 %v526, -0.00073499064
    %v543 = vadd.f32 %v527, -0.00073499064
    %v544 = vadd.f32 %v528, -0.00073499064
    %v545 = vmul.f32 %v529, %v401
    %v546 = vmul.f32 %v530, %v402
    %v547 = vmul.f32 %v531, %v403
    %v548 = vmul.f32 %v532, %v404
    %v549 = vmul.f32 %v533, %v405
    %v550 = vmul.f32 %v534, %v406
    %v551 = vmul.f32 %v535, %v407
    %v552 = vmul.f32 %v536, %v408
    %v553 = vmul.f32 %v537, %v409
    %v554 = vmul.f32 %v538, %v410
    %v555 = vmul.f32 %v539, %v411
    %v556 = vmul.f32 %v540, %v412
    %v557 = vmul.f32 %v541, %v413
    %v558 = vmul.f32 %v542, %v414
    %v559 = vmul.f32 %v543, %v415
    %v560 = vmul.f32 %v544, %v416
    %v561 = vadd.f32 %v545, -0.0029546
    %v562 = vadd.f32 %v546, -0.0029546
    %v563 = vadd.f32 %v547, -0.0029546
    %v564 = vadd.f32 %v548, -0.0029546
    %v565 = vadd.f32 %v549, -0.0029546
    %v566 = vadd.f32 %v550, -0.0029546
    %v567 = vadd.f32 %v551, -0.0029546
    %v568 = vadd.f32 %v552, -0.0029546
    %v569 = vadd.f32 %v553, -0.0029546
    %v570 = vadd.f32 %v554, -0.0029546
    %v571 = vadd.f32 %v555, -0.0029546
    %v572 = vadd.f32 %v556, -0.0029546
    %v573 = vadd.f32 %v557, -0.0029546
    %v574 = vadd.f32 %v558, -0.0029546
    %v575 = vadd.f32 %v559, -0.0029546
    %v576 = vadd.f32 %v560, -0.0029546
    %v577 = vmul.f32 %v561, %v401
    %v578 = vmul.f32 %v562, %v402
    %v579 = vmul.f32 %v563, %v403
    %v580 = vmul.f32 %v564, %v404
    %v581 = vmul.f32 %v565, %v405
    %v582 = vmul.f32 %v566, %v406
    %v583 = vmul.f32 %v567, %v407
    %v584 = vmul.f32 %v568, %v408
    %v585 = vmul.f32 %v569, %v409
    %v586 = vmul.f32 %v570, %v410
    %v587 = vmul.f32 %v571, %v411
    %v588 = vmul.f32 %v572, %v412
    %v589 = vmul.f32 %v573, %v413
    %v590 = vmul.f32 %v574, %v414
    %v591 = vmul.f32 %v575, %v415
    %v592 = vmul.f32 %v576, %v416
    %v593 = vadd.f32 %v577, -0.016096033
    %v594 = vadd.f32 %v578, -0.016096033
    %v595 = vadd.f32 %v579, -0.016096033
    %v596 = vadd.f32 %v580, -0.016096033
    %v597 = vadd.f32 %v581, -0.016096033
    %v598 = vadd.f32 %v582, -0.016096033
    %v599 = vadd.f32 %v583, -0.016096033
    %v600 = vadd.f32 %v584, -0.016096033
    %v601 = vadd.f32 %v585, -0.016096033
    %v602 = vadd.f32 %v586, -0.016096033
    %v603 = vadd.f32 %v587, -0.016096033
    %v604 = vadd.f32 %v588, -0.016096033
    %v605 = vadd.f32 %v589, -0.016096033
    %v606 = vadd.f32 %v590, -0.016096033
    %v607 = vadd.f32 %v591, -0.016096033
    %v608 = vadd.f32 %v592, -0.016096033
    %v609 = vmul.f32 %v593, %v385
    %v610 = vmul.f32 %v594, %v386
    %v611 = vmul.f32 %v595, %v387
    %v612 = vmul.f32 %v596, %v388
    %v613 = vmul.f32 %v597, %v389
    %v614 = vmul.f32 %v598, %v390
    %v615 = vmul.f32 %v599, %v391
    %v616 = vmul.f32 %v600, %v392
    %v617 = vmul.f32 %v601, %v393
    %v618 = vmul.f32 %v602, %v394
    %v619 = vmul.f32 %v603, %v395
    %v620 = vmul.f32 %v604, %v396
    %v621 = vmul.f32 %v605, %v397
    %v622 = vmul.f32 %v606, %v398
    %v623 = vmul.f32 %v607, %v399
    %v624 = vmul.f32 %v608, %v400
    %v625 = vmul.f32 %v401, -1.45660715e-05
    %v626 = vmul.f32 %v402, -1.45660715e-05
    %v627 = vmul.f32 %v403, -1.45660715e-05
    %v628 = vmul.f32 %v404, -1.45660715e-05
    %v629 = vmul.f32 %v405, -1.45660715e-05
    %v630 = vmul.f32 %v406, -1.45660715e-05
    %v631 = vmul.f32 %v407, -1.45660715e-05
    %v632 = vmul.f32 %v408, -1.45660715e-05
    %v633 = vmul.f32 %v409, -1.45660715e-05
    %v634 = vmul.f32 %v410, -1.45660715e-05
    %v635 = vmul.f32 %v411, -1.45660715e-05
    %v636 = vmul.f32 %v412, -1.45660715e-05
    %v637 = vmul.f32 %v413, -1.45660715e-05
    %v638 = vmul.f32 %v414, -1.45660715e-05
    %v639 = vmul.f32 %v415, -1.45660715e-05
    %v640 = vmul.f32 %v416, -1.45660715e-05
    %v641 = vadd.f32 %v625, -0.00021337405
    %v642 = vadd.f32 %v626, -0.00021337405
    %v643 = vadd.f32 %v627, -0.00021337405
    %v644 = vadd.f32 %v628, -0.00021337405
    %v645 = vadd.f32 %v629, -0.00021337405
    %v646 = vadd.f32 %v630, -0.00021337405
    %v647 = vadd.f32 %v631, -0.00021337405
    %v648 = vadd.f32 %v632, -0.00021337405
    %v649 = vadd.f32 %v633, -0.00021337405
    %v650 = vadd.f32 %v634, -0.00021337405
    %v651 = vadd.f32 %v635, -0.00021337405
    %v652 = vadd.f32 %v636, -0.00021337405
    %v653 = vadd.f32 %v637, -0.00021337405
    %v654 = vadd.f32 %v638, -0.00021337405
    %v655 = vadd.f32 %v639, -0.00021337405
    %v656 = vadd.f32 %v640, -0.00021337405
    %v657 = vmul.f32 %v641, %v401
    %v658 = vmul.f32 %v642, %v402
    %v659 = vmul.f32 %v643, %v403
    %v660 = vmul.f32 %v644, %v404
    %v661 = vmul.f32 %v645, %v405
    %v662 = vmul.f32 %v646, %v406
    %v663 = vmul.f32 %v647, %v407
    %v664 = vmul.f32 %v648, %v408
    %v665 = vmul.f32 %v649, %v409
    %v666 = vmul.f32 %v650, %v410
    %v667 = vmul.f32 %v651, %v411
    %v668 = vmul.f32 %v652, %v412
    %v669 = vmul.f32 %v653, %v413
    %v670 = vmul.f32 %v654, %v414
    %v671 = vmul.f32 %v655, %v415
    %v672 = vmul.f32 %v656, %v416
    %v673 = vadd.f32 %v657, -0.001682827
    %v674 = vadd.f32 %v658, -0.001682827
    %v675 = vadd.f32 %v659, -0.001682827
    %v676 = vadd.f32 %v660, -0.001682827
    %v677 = vadd.f32 %v661, -0.001682827
    %v678 = vadd.f32 %v662, -0.001682827
    %v679 = vadd.f32 %v663, -0.001682827
    %v680 = vadd.f32 %v664, -0.001682827
    %v681 = vadd.f32 %v665, -0.001682827
    %v682 = vadd.f32 %v666, -0.001682827
    %v683 = vadd.f32 %v667, -0.001682827
    %v684 = vadd.f32 %v668, -0.001682827
    %v685 = vadd.f32 %v669, -0.001682827
    %v686 = vadd.f32 %v670, -0.001682827
    %v687 = vadd.f32 %v671, -0.001682827
    %v688 = vadd.f32 %v672, -0.001682827
    %v689 = vmul.f32 %v673, %v401
    %v690 = vmul.f32 %v674, %v402
    %v691 = vmul.f32 %v675, %v403
    %v692 = vmul.f32 %v676, %v404
    %v693 = vmul.f32 %v677, %v405
    %v694 = vmul.f32 %v678, %v406
    %v695 = vmul.f32 %v679, %v407
    %v696 = vmul.f32 %v680, %v408
    %v697 = vmul.f32 %v681, %v409
    %v698 = vmul.f32 %v682, %v410
    %v699 = vmul.f32 %v683, %v411
    %v700 = vmul.f32 %v684, %v412
    %v701 = vmul.f32 %v685, %v413
    %v702 = vmul.f32 %v686, %v414
    %v703 = vmul.f32 %v687, %v415
    %v704 = vmul.f32 %v688, %v416
    %v705 = vadd.f32 %v689, -0.0073733293
    %v706 = vadd.f32 %v690, -0.0073733293
    %v707 = vadd.f32 %v691, -0.0073733293
    %v708 = vadd.f32 %v692, -0.0073733293
    %v709 = vadd.f32 %v693, -0.0073733293
    %v710 = vadd.f32 %v694, -0.0073733293
    %v711 = vadd.f32 %v695, -0.0073733293
    %v712 = vadd.f32 %v696, -0.0073733293
    %v713 = vadd.f32 %v697, -0.0073733293
    %v714 = vadd.f32 %v698, -0.0073733293
    %v715 = vadd.f32 %v699, -0.0073733293
    %v716 = vadd.f32 %v700, -0.0073733293
    %v717 = vadd.f32 %v701, -0.0073733293
    %v718 = vadd.f32 %v702, -0.0073733293
    %v719 = vadd.f32 %v703, -0.0073733293
    %v720 = vadd.f32 %v704, -0.0073733293
    %v721 = vmul.f32 %v705, %v401
    %v722 = vmul.f32 %v706, %v402
    %v723 = vmul.f32 %v707, %v403
    %v724 = vmul.f32 %v708, %v404
    %v725 = vmul.f32 %v709, %v405
    %v726 = vmul.f32 %v710, %v406
    %v727 = vmul.f32 %v711, %v407
    %v728 = vmul.f32 %v712, %v408
    %v729 = vmul.f32 %v713, %v409
    %v730 = vmul.f32 %v714, %v410
    %v731 = vmul.f32 %v715, %v411
    %v732 = vmul.f32 %v716, %v412
    %v733 = vmul.f32 %v717, %v413
    %v734 = vmul.f32 %v718, %v414
    %v735 = vmul.f32 %v719, %v415
    %v736 = vmul.f32 %v720, %v416
    %v737 = vadd.f32 %v721, -0.014264739
    %v738 = vadd.f32 %v722, -0.014264739
    %v739 = vadd.f32 %v723, -0.014264739
    %v740 = vadd.f32 %v724, -0.014264739
    %v741 = vadd.f32 %v725, -0.014264739
    %v742 = vadd.f32 %v726, -0.014264739
    %v743 = vadd.f32 %v727, -0.014264739
    %v744 = vadd.f32 %v728, -0.014264739
    %v745 = vadd.f32 %v729, -0.014264739
    %v746 = vadd.f32 %v730, -0.014264739
    %v747 = vadd.f32 %v731, -0.014264739
    %v748 = vadd.f32 %v732, -0.014264739
    %v749 = vadd.f32 %v733, -0.014264739
    %v750 = vadd.f32 %v734, -0.014264739
    %v751 = vadd.f32 %v735, -0.014264739
    %v752 = vadd.f32 %v736, -0.014264739
    %v753 = vrcp.pop %v737
    %v754 = vmul.f32 %v737, %v753
    %v755 = vsub.f32 1.0, %v754
    %v756 = vmul.f32 %v753, %v755
    %v757 = vadd.f32 %v753, %v756
    %vm758 = vweird.f32 %v737
    %vm759 = vweird.f32 %v753
    %vm760 = vmor %vm758, %vm759
    %v761 = vsel %vm760, %v753, %v757
    %v762 = vand.u32 2147483647, %v737
    %vm763 = vcmp.eq.f32.partialorder %v762, 8.507059e+37
    %v764 = vand.u32 %v737, 2147483648
    %v765 = vor.u32 1.1754944e-38, %v764
    %v766 = vsel %vm763, %v765, %v761
    %v767 = vrcp.pop %v738
    %v768 = vmul.f32 %v738, %v767
    %v769 = vsub.f32 1.0, %v768
    %v770 = vmul.f32 %v767, %v769
    %v771 = vadd.f32 %v767, %v770
    %vm772 = vweird.f32 %v738
    %vm773 = vweird.f32 %v767
    %vm774 = vmor %vm772, %vm773
    %v775 = vsel %vm774, %v767, %v771
    %v776 = vand.u32 2147483647, %v738
    %vm777 = vcmp.eq.f32.partialorder %v776, 8.507059e+37
    %v778 = vand.u32 %v738, 2147483648
    %v779 = vor.u32 1.1754944e-38, %v778
    %v780 = vsel %vm777, %v779, %v775
    %v781 = vrcp.pop %v739
    %v782 = vmul.f32 %v739, %v781
    %v783 = vsub.f32 1.0, %v782
    %v784 = vmul.f32 %v781, %v783
    %v785 = vadd.f32 %v781, %v784
    %vm786 = vweird.f32 %v739
    %vm787 = vweird.f32 %v781
    %vm788 = vmor %vm786, %vm787
    %v789 = vsel %vm788, %v781, %v785
    %v790 = vand.u32 2147483647, %v739
    %vm791 = vcmp.eq.f32.partialorder %v790, 8.507059e+37
    %v792 = vand.u32 %v739, 2147483648
    %v793 = vor.u32 1.1754944e-38, %v792
    %v794 = vsel %vm791, %v793, %v789
    %v795 = vrcp.pop %v740
    %v796 = vmul.f32 %v740, %v795
    %v797 = vsub.f32 1.0, %v796
    %v798 = vmul.f32 %v795, %v797
    %v799 = vadd.f32 %v795, %v798
    %vm800 = vweird.f32 %v740
    %vm801 = vweird.f32 %v795
    %vm802 = vmor %vm800, %vm801
    %v803 = vsel %vm802, %v795, %v799
    %v804 = vand.u32 2147483647, %v740
    %vm805 = vcmp.eq.f32.partialorder %v804, 8.507059e+37
    %v806 = vand.u32 %v740, 2147483648
    %v807 = vor.u32 1.1754944e-38, %v806
    %v808 = vsel %vm805, %v807, %v803
    %v809 = vrcp.pop %v741
    %v810 = vmul.f32 %v741, %v809
    %v811 = vsub.f32 1.0, %v810
    %v812 = vmul.f32 %v809, %v811
    %v813 = vadd.f32 %v809, %v812
    %vm814 = vweird.f32 %v741
    %vm815 = vweird.f32 %v809
    %vm816 = vmor %vm814, %vm815
    %v817 = vsel %vm816, %v809, %v813
    %v818 = vand.u32 2147483647, %v741
    %vm819 = vcmp.eq.f32.partialorder %v818, 8.507059e+37
    %v820 = vand.u32 %v741, 2147483648
    %v821 = vor.u32 1.1754944e-38, %v820
    %v822 = vsel %vm819, %v821, %v817
    %v823 = vrcp.pop %v742
    %v824 = vmul.f32 %v742, %v823
    %v825 = vsub.f32 1.0, %v824
    %v826 = vmul.f32 %v823, %v825
    %v827 = vadd.f32 %v823, %v826
    %vm828 = vweird.f32 %v742
    %vm829 = vweird.f32 %v823
    %vm830 = vmor %vm828, %vm829
    %v831 = vsel %vm830, %v823, %v827
    %v832 = vand.u32 2147483647, %v742
    %vm833 = vcmp.eq.f32.partialorder %v832, 8.507059e+37
    %v834 = vand.u32 %v742, 2147483648
    %v835 = vor.u32 1.1754944e-38, %v834
    %v836 = vsel %vm833, %v835, %v831
    %v837 = vrcp.pop %v743
    %v838 = vmul.f32 %v743, %v837
    %v839 = vsub.f32 1.0, %v838
    %v840 = vmul.f32 %v837, %v839
    %v841 = vadd.f32 %v837, %v840
    %vm842 = vweird.f32 %v743
    %vm843 = vweird.f32 %v837
    %vm844 = vmor %vm842, %vm843
    %v845 = vsel %vm844, %v837, %v841
    %v846 = vand.u32 2147483647, %v743
    %vm847 = vcmp.eq.f32.partialorder %v846, 8.507059e+37
    %v848 = vand.u32 %v743, 2147483648
    %v849 = vor.u32 1.1754944e-38, %v848
    %v850 = vsel %vm847, %v849, %v845
    %v851 = vrcp.pop %v744
    %v852 = vmul.f32 %v744, %v851
    %v853 = vsub.f32 1.0, %v852
    %v854 = vmul.f32 %v851, %v853
    %v855 = vadd.f32 %v851, %v854
    %vm856 = vweird.f32 %v744
    %vm857 = vweird.f32 %v851
    %vm858 = vmor %vm856, %vm857
    %v859 = vsel %vm858, %v851, %v855
    %v860 = vand.u32 2147483647, %v744
    %vm861 = vcmp.eq.f32.partialorder %v860, 8.507059e+37
    %v862 = vand.u32 %v744, 2147483648
    %v863 = vor.u32 1.1754944e-38, %v862
    %v864 = vsel %vm861, %v863, %v859
    %v865 = vrcp.pop %v745
    %v866 = vmul.f32 %v745, %v865
    %v867 = vsub.f32 1.0, %v866
    %v868 = vmul.f32 %v865, %v867
    %v869 = vadd.f32 %v865, %v868
    %vm870 = vweird.f32 %v745
    %vm871 = vweird.f32 %v865
    %vm872 = vmor %vm870, %vm871
    %v873 = vsel %vm872, %v865, %v869
    %v874 = vand.u32 2147483647, %v745
    %vm875 = vcmp.eq.f32.partialorder %v874, 8.507059e+37
    %v876 = vand.u32 %v745, 2147483648
    %v877 = vor.u32 1.1754944e-38, %v876
    %v878 = vsel %vm875, %v877, %v873
    %v879 = vrcp.pop %v746
    %v880 = vmul.f32 %v746, %v879
    %v881 = vsub.f32 1.0, %v880
    %v882 = vmul.f32 %v879, %v881
    %v883 = vadd.f32 %v879, %v882
    %vm884 = vweird.f32 %v746
    %vm885 = vweird.f32 %v879
    %vm886 = vmor %vm884, %vm885
    %v887 = vsel %vm886, %v879, %v883
    %v888 = vand.u32 2147483647, %v746
    %vm889 = vcmp.eq.f32.partialorder %v888, 8.507059e+37
    %v890 = vand.u32 %v746, 2147483648
    %v891 = vor.u32 1.1754944e-38, %v890
    %v892 = vsel %vm889, %v891, %v887
    %v893 = vrcp.pop %v747
    %v894 = vmul.f32 %v747, %v893
    %v895 = vsub.f32 1.0, %v894
    %v896 = vmul.f32 %v893, %v895
    %v897 = vadd.f32 %v893, %v896
    %vm898 = vweird.f32 %v747
    %vm899 = vweird.f32 %v893
    %vm900 = vmor %vm898, %vm899
    %v901 = vsel %vm900, %v893, %v897
    %v902 = vand.u32 2147483647, %v747
    %vm903 = vcmp.eq.f32.partialorder %v902, 8.507059e+37
    %v904 = vand.u32 %v747, 2147483648
    %v905 = vor.u32 1.1754944e-38, %v904
    %v906 = vsel %vm903, %v905, %v901
    %v907 = vrcp.pop %v748
    %v908 = vmul.f32 %v748, %v907
    %v909 = vsub.f32 1.0, %v908
    %v910 = vmul.f32 %v907, %v909
    %v911 = vadd.f32 %v907, %v910
    %vm912 = vweird.f32 %v748
    %vm913 = vweird.f32 %v907
    %vm914 = vmor %vm912, %vm913
    %v915 = vsel %vm914, %v907, %v911
    %v916 = vand.u32 2147483647, %v748
    %vm917 = vcmp.eq.f32.partialorder %v916, 8.507059e+37
    %v918 = vand.u32 %v748, 2147483648
    %v919 = vor.u32 1.1754944e-38, %v918
    %v920 = vsel %vm917, %v919, %v915
    %v921 = vrcp.pop %v749
    %v922 = vmul.f32 %v749, %v921
    %v923 = vsub.f32 1.0, %v922
    %v924 = vmul.f32 %v921, %v923
    %v925 = vadd.f32 %v921, %v924
    %vm926 = vweird.f32 %v749
    %vm927 = vweird.f32 %v921
    %vm928 = vmor %vm926, %vm927
    %v929 = vsel %vm928, %v921, %v925
    %v930 = vand.u32 2147483647, %v749
    %vm931 = vcmp.eq.f32.partialorder %v930, 8.507059e+37
    %v932 = vand.u32 %v749, 2147483648
    %v933 = vor.u32 1.1754944e-38, %v932
    %v934 = vsel %vm931, %v933, %v929
    %v935 = vrcp.pop %v750
    %v936 = vmul.f32 %v750, %v935
    %v937 = vsub.f32 1.0, %v936
    %v938 = vmul.f32 %v935, %v937
    %v939 = vadd.f32 %v935, %v938
    %vm940 = vweird.f32 %v750
    %vm941 = vweird.f32 %v935
    %vm942 = vmor %vm940, %vm941
    %v943 = vsel %vm942, %v935, %v939
    %v944 = vand.u32 2147483647, %v750
    %vm945 = vcmp.eq.f32.partialorder %v944, 8.507059e+37
    %v946 = vand.u32 %v750, 2147483648
    %v947 = vor.u32 1.1754944e-38, %v946
    %v948 = vsel %vm945, %v947, %v943
    %v949 = vrcp.pop %v751
    %v950 = vmul.f32 %v751, %v949
    %v951 = vsub.f32 1.0, %v950
    %v952 = vmul.f32 %v949, %v951
    %v953 = vadd.f32 %v949, %v952
    %vm954 = vweird.f32 %v751
    %vm955 = vweird.f32 %v949
    %vm956 = vmor %vm954, %vm955
    %v957 = vsel %vm956, %v949, %v953
    %v958 = vand.u32 2147483647, %v751
    %vm959 = vcmp.eq.f32.partialorder %v958, 8.507059e+37
    %v960 = vand.u32 %v751, 2147483648
    %v961 = vor.u32 1.1754944e-38, %v960
    %v962 = vsel %vm959, %v961, %v957
    %v963 = vrcp.pop %v752
    %v964 = vmul.f32 %v752, %v963
    %v965 = vsub.f32 1.0, %v964
    %v966 = vmul.f32 %v963, %v965
    %v967 = vadd.f32 %v963, %v966
    %vm968 = vweird.f32 %v752
    %vm969 = vweird.f32 %v963
    %vm970 = vmor %vm968, %vm969
    %v971 = vsel %vm970, %v963, %v967
    %v972 = vand.u32 2147483647, %v752
    %vm973 = vcmp.eq.f32.partialorder %v972, 8.507059e+37
    %v974 = vand.u32 %v752, 2147483648
    %v975 = vor.u32 1.1754944e-38, %v974
    %v976 = vsel %vm973, %v975, %v971
    %v977 = vmul.f32 %v609, %v766
    %v978 = vmul.f32 %v610, %v780
    %v979 = vmul.f32 %v611, %v794
    %v980 = vmul.f32 %v612, %v808
    %v981 = vmul.f32 %v613, %v822
    %v982 = vmul.f32 %v614, %v836
    %v983 = vmul.f32 %v615, %v850
    %v984 = vmul.f32 %v616, %v864
    %v985 = vmul.f32 %v617, %v878
    %v986 = vmul.f32 %v618, %v892
    %v987 = vmul.f32 %v619, %v906
    %v988 = vmul.f32 %v620, %v920
    %v989 = vmul.f32 %v621, %v934
    %v990 = vmul.f32 %v622, %v948
    %v991 = vmul.f32 %v623, %v962
    %v992 = vmul.f32 %v624, %v976
    %v993 = vadd.f32 %v977, 1.0
    %v994 = vadd.f32 %v978, 1.0
    %v995 = vadd.f32 %v979, 1.0
    %v996 = vadd.f32 %v980, 1.0
    %v997 = vadd.f32 %v981, 1.0
    %v998 = vadd.f32 %v982, 1.0
    %v999 = vadd.f32 %v983, 1.0
    %v1000 = vadd.f32 %v984, 1.0
    %v1001 = vadd.f32 %v985, 1.0
    %v1002 = vadd.f32 %v986, 1.0
    %v1003 = vadd.f32 %v987, 1.0
    %v1004 = vadd.f32 %v988, 1.0
    %v1005 = vadd.f32 %v989, 1.0
    %v1006 = vadd.f32 %v990, 1.0
    %v1007 = vadd.f32 %v991, 1.0
    %v1008 = vadd.f32 %v992, 1.0
    %v1009 = vmul.f32 %v337, %v993
    %v1010 = vmul.f32 %v338, %v994
    %v1011 = vmul.f32 %v339, %v995
    %v1012 = vmul.f32 %v340, %v996
    %v1013 = vmul.f32 %v341, %v997
    %v1014 = vmul.f32 %v342, %v998
    %v1015 = vmul.f32 %v343, %v999
    %v1016 = vmul.f32 %v344, %v1000
    %v1017 = vmul.f32 %v345, %v1001
    %v1018 = vmul.f32 %v346, %v1002
    %v1019 = vmul.f32 %v347, %v1003
    %v1020 = vmul.f32 %v348, %v1004
    %v1021 = vmul.f32 %v349, %v1005
    %v1022 = vmul.f32 %v350, %v1006
    %v1023 = vmul.f32 %v351, %v1007
    %v1024 = vmul.f32 %v352, %v1008
    %v1025 = vld [vmem:[%s5] sm:$0xff]
    %v1026 = vld [vmem:[%s5 + $0x8] sm:$0xff]
    %v1027 = vpack.c.bf16 %v1026, %v1025
    %v1028 = vld [vmem:[%s6] sm:$0xff]
    %v1029 = vld [vmem:[%s6 + $0x8] sm:$0xff]
    %v1030 = vld [vmem:[%s6 + $0x10] sm:$0xff]
    %v1031 = vld [vmem:[%s6 + $0x18] sm:$0xff]
    %v1032 = vld [vmem:[%s6 + $0x20] sm:$0xff]
    %v1033 = vld [vmem:[%s6 + $0x28] sm:$0xff]
    %v1034 = vld [vmem:[%s6 + $0x30] sm:$0xff]
    %v1035 = vld [vmem:[%s6 + $0x38] sm:$0xff]
    %v1044 = vunpack.c.l.b16 %v1028
    %v1045 = vunpack.c.h.b16 %v1028
    %v1046 = vunpack.c.l.b16 %v1029
    %v1047 = vunpack.c.h.b16 %v1029
    %v1048 = vunpack.c.l.b16 %v1030
    %v1049 = vunpack.c.h.b16 %v1030
    %v1050 = vunpack.c.l.b16 %v1031
    %v1051 = vunpack.c.h.b16 %v1031
    %v1052 = vunpack.c.l.b16 %v1032
    %v1053 = vunpack.c.h.b16 %v1032
    %v1054 = vunpack.c.l.b16 %v1033
    %v1055 = vunpack.c.h.b16 %v1033
    %v1056 = vunpack.c.l.b16 %v1034
    %v1057 = vunpack.c.h.b16 %v1034
    %v1058 = vunpack.c.l.b16 %v1035
    %v1059 = vunpack.c.h.b16 %v1035
    %v1060 = vpack.c.b16 %v1052, %v1044
    %v1061 = vpack.c.b16 %v1053, %v1045
    %v1062 = vpack.c.b16 %v1054, %v1046
    %v1063 = vpack.c.b16 %v1055, %v1047
    %v1064 = vpack.c.b16 %v1056, %v1048
    %v1065 = vpack.c.b16 %v1057, %v1049
    %v1066 = vpack.c.b16 %v1058, %v1050
    %v1067 = vpack.c.b16 %v1059, %v1051
    %vm1076 = vcmask 130048
    %v1078 = vsel %vm1076, %v1027, 0
    %1080 = vmatpush.bf16.msra.mxu0 0
    %1081 = vmatpush.bf16.msra.mxu0 0
    %1082 = vmatpush.bf16.msra.mxu0 0
    %1083 = vmatpush.bf16.msra.mxu0 0
    %1084 = vmatpush.bf16.msra.mxu0 0
    %1085 = vmatpush.bf16.msra.mxu0 0
    %1086 = vmatpush.bf16.msra.mxu0 0
    %1087 = vmatpush.bf16.msra.mxu0 %v1060
    %1088 = vmatmul.bf16.gmra.mxu0 %v1078
    %v1089 = vpop.f32.mrf.mxu0
    %v1090 = vadd.f32 0.0, %v1089
    %v1091 = vpop.f32.mrf.mxu0
    %v1092 = vadd.f32 0.0, %v1091
    %1093 = vdwg.mxu0
    %1094 = vmatpush.bf16.msra.mxu0 0
    %1095 = vmatpush.bf16.msra.mxu0 0
    %1096 = vmatpush.bf16.msra.mxu0 0
    %1097 = vmatpush.bf16.msra.mxu0 0
    %1098 = vmatpush.bf16.msra.mxu0 0
    %1099 = vmatpush.bf16.msra.mxu0 0
    %1100 = vmatpush.bf16.msra.mxu0 0
    %1101 = vmatpush.bf16.msra.mxu0 %v1061
    %1102 = vmatmul.bf16.gmra.mxu0 %v1078
    %v1103 = vpop.f32.mrf.mxu0
    %v1104 = vadd.f32 0.0, %v1103
    %v1105 = vpop.f32.mrf.mxu0
    %v1106 = vadd.f32 0.0, %v1105
    %1107 = vdwg.mxu0
    %1108 = vmatpush.bf16.msra.mxu0 0
    %1109 = vmatpush.bf16.msra.mxu0 0
    %1110 = vmatpush.bf16.msra.mxu0 0
    %1111 = vmatpush.bf16.msra.mxu0 0
    %1112 = vmatpush.bf16.msra.mxu0 0
    %1113 = vmatpush.bf16.msra.mxu0 0
    %1114 = vmatpush.bf16.msra.mxu0 0
    %1115 = vmatpush.bf16.msra.mxu0 %v1062
    %1116 = vmatmul.bf16.gmra.mxu0 %v1078
    %v1117 = vpop.f32.mrf.mxu0
    %v1118 = vadd.f32 0.0, %v1117
    %v1119 = vpop.f32.mrf.mxu0
    %v1120 = vadd.f32 0.0, %v1119
    %1121 = vdwg.mxu0
    %1122 = vmatpush.bf16.msra.mxu0 0
    %1123 = vmatpush.bf16.msra.mxu0 0
    %1124 = vmatpush.bf16.msra.mxu0 0
    %1125 = vmatpush.bf16.msra.mxu0 0
    %1126 = vmatpush.bf16.msra.mxu0 0
    %1127 = vmatpush.bf16.msra.mxu0 0
    %1128 = vmatpush.bf16.msra.mxu0 0
    %1129 = vmatpush.bf16.msra.mxu0 %v1063
    %1130 = vmatmul.bf16.gmra.mxu0 %v1078
    %v1131 = vpop.f32.mrf.mxu0
    %v1132 = vadd.f32 0.0, %v1131
    %v1133 = vpop.f32.mrf.mxu0
    %v1134 = vadd.f32 0.0, %v1133
    %1135 = vdwg.mxu0
    %1136 = vmatpush.bf16.msra.mxu0 0
    %1137 = vmatpush.bf16.msra.mxu0 0
    %1138 = vmatpush.bf16.msra.mxu0 0
    %1139 = vmatpush.bf16.msra.mxu0 0
    %1140 = vmatpush.bf16.msra.mxu0 0
    %1141 = vmatpush.bf16.msra.mxu0 0
    %1142 = vmatpush.bf16.msra.mxu0 0
    %1143 = vmatpush.bf16.msra.mxu0 %v1064
    %1144 = vmatmul.bf16.gmra.mxu0 %v1078
    %v1145 = vpop.f32.mrf.mxu0
    %v1146 = vadd.f32 0.0, %v1145
    %v1147 = vpop.f32.mrf.mxu0
    %v1148 = vadd.f32 0.0, %v1147
    %1149 = vdwg.mxu0
    %1150 = vmatpush.bf16.msra.mxu0 0
    %1151 = vmatpush.bf16.msra.mxu0 0
    %1152 = vmatpush.bf16.msra.mxu0 0
    %1153 = vmatpush.bf16.msra.mxu0 0
    %1154 = vmatpush.bf16.msra.mxu0 0
    %1155 = vmatpush.bf16.msra.mxu0 0
    %1156 = vmatpush.bf16.msra.mxu0 0
    %1157 = vmatpush.bf16.msra.mxu0 %v1065
    %1158 = vmatmul.bf16.gmra.mxu0 %v1078
    %v1159 = vpop.f32.mrf.mxu0
    %v1160 = vadd.f32 0.0, %v1159
    %v1161 = vpop.f32.mrf.mxu0
    %v1162 = vadd.f32 0.0, %v1161
    %1163 = vdwg.mxu0
    %1164 = vmatpush.bf16.msra.mxu0 0
    %1165 = vmatpush.bf16.msra.mxu0 0
    %1166 = vmatpush.bf16.msra.mxu0 0
    %1167 = vmatpush.bf16.msra.mxu0 0
    %1168 = vmatpush.bf16.msra.mxu0 0
    %1169 = vmatpush.bf16.msra.mxu0 0
    %1170 = vmatpush.bf16.msra.mxu0 0
    %1171 = vmatpush.bf16.msra.mxu0 %v1066
    %1172 = vmatmul.bf16.gmra.mxu0 %v1078
    %v1173 = vpop.f32.mrf.mxu0
    %v1174 = vadd.f32 0.0, %v1173
    %v1175 = vpop.f32.mrf.mxu0
    %v1176 = vadd.f32 0.0, %v1175
    %1177 = vdwg.mxu0
    %1178 = vmatpush.bf16.msra.mxu0 0
    %1179 = vmatpush.bf16.msra.mxu0 0
    %1180 = vmatpush.bf16.msra.mxu0 0
    %1181 = vmatpush.bf16.msra.mxu0 0
    %1182 = vmatpush.bf16.msra.mxu0 0
    %1183 = vmatpush.bf16.msra.mxu0 0
    %1184 = vmatpush.bf16.msra.mxu0 0
    %1185 = vmatpush.bf16.msra.mxu0 %v1067
    %1186 = vmatmul.bf16.gmra.mxu0 %v1078
    %v1187 = vpop.f32.mrf.mxu0
    %v1188 = vadd.f32 0.0, %v1187
    %v1189 = vpop.f32.mrf.mxu0
    %v1190 = vadd.f32 0.0, %v1189
    %1191 = vdwg.mxu0
    %v1192 = vmul.f32 %v1009, %v1090
    %v1193 = vmul.f32 %v1010, %v1104
    %v1194 = vmul.f32 %v1011, %v1118
    %v1195 = vmul.f32 %v1012, %v1132
    %v1196 = vmul.f32 %v1013, %v1146
    %v1197 = vmul.f32 %v1014, %v1160
    %v1198 = vmul.f32 %v1015, %v1174
    %v1199 = vmul.f32 %v1016, %v1188
    %v1200 = vmul.f32 %v1017, %v1092
    %v1201 = vmul.f32 %v1018, %v1106
    %v1202 = vmul.f32 %v1019, %v1120
    %v1203 = vmul.f32 %v1020, %v1134
    %v1204 = vmul.f32 %v1021, %v1148
    %v1205 = vmul.f32 %v1022, %v1162
    %v1206 = vmul.f32 %v1023, %v1176
    %v1207 = vmul.f32 %v1024, %v1190
    %v1208 = vpack.c.bf16 %v1200, %v1192
    %v1209 = vpack.c.bf16 %v1201, %v1193
    %v1210 = vpack.c.bf16 %v1202, %v1194
    %v1211 = vpack.c.bf16 %v1203, %v1195
    %v1212 = vpack.c.bf16 %v1204, %v1196
    %v1213 = vpack.c.bf16 %v1205, %v1197
    %v1214 = vpack.c.bf16 %v1206, %v1198
    %v1215 = vpack.c.bf16 %v1207, %v1199
    // Predicated region
    $region34: #{self_refining_moe_forward.3} parent=1 // pred_check
      %p1216 = pneg %p92
    $region35: #{self_refining_moe_forward.3} parent=1 // pred_check_branch
      %1218 = sbr.rel (%p1216) target = $region37
    $region36: #{self_refining_moe_forward.3} parent=1 // pred_region
      %v1219 = vld [vmem:[#allocation2] sm:$0xff]
      %v1220 = vld [vmem:[#allocation2 + $0x8] sm:$0xff]
      %v1221 = vld [vmem:[%s4] sm:$0xf]
      %v1222 = vld [vmem:[%s4 + $0x4] sm:$0xf]
      %v1225 = vunpack.c.l.b16 %v1221
      %v1226 = vunpack.c.l.b16 %v1222
      %v1227 = vpack.c.b16 %v1226, %v1225
      %1229 = vmatpush.bf16.msra.mxu0 0
      %1230 = vmatpush.bf16.msra.mxu0 0
      %1231 = vmatpush.bf16.msra.mxu0 0
      %1232 = vmatpush.bf16.msra.mxu0 0
      %1233 = vmatpush.bf16.msra.mxu0 0
      %1234 = vmatpush.bf16.msra.mxu0 0
      %1235 = vmatpush.bf16.msra.mxu0 0
      %1236 = vmatpush.bf16.msra.mxu0 %v1227
      %1237 = vmatmul.bf16.gmra.mxu0 %v1078
      %v1238 = vpop.f32.mrf.mxu0
      %v1239 = vadd.f32 0.0, %v1238
      %v1240 = vpop.f32.mrf.mxu0
      %v1241 = vadd.f32 0.0, %v1240
      %1242 = vdwg.mxu0
      %v1243 = vadd.f32 %v1219, %v1239
      %v1244 = vadd.f32 %v1220, %v1241
      %1245 = vst.msk [vmem:[#allocation2] sm:$0xff] %vm221, %v1243
      %1246 = vst.msk [vmem:[#allocation2 + $0x8] sm:$0xff] %vm221, %v1244
    $region37: #{self_refining_moe_forward.3} parent=1 // pred_fallthru
      _
    %v1247 = vld [vmem:[#allocation2] sm:$0xff]
    %v1248 = vld [vmem:[#allocation2 + $0x8] sm:$0xff]
    %v1249 = vld [vmem:[%s87] sm:$0xf]
    %v1250 = vld [vmem:[%s87 + $0x4] sm:$0xf]
    %v1251 = vld [vmem:[%s87 + $0x8] sm:$0xf]
    %v1252 = vld [vmem:[%s87 + $0xc] sm:$0xf]
    %v1253 = vld [vmem:[%s87 + $0x10] sm:$0xf]
    %v1254 = vld [vmem:[%s87 + $0x14] sm:$0xf]
    %v1255 = vld [vmem:[%s87 + $0x18] sm:$0xf]
    %v1256 = vld [vmem:[%s87 + $0x1c] sm:$0xf]
    %v1257 = vld [vmem:[%s87 + $0x20] sm:$0xf]
    %v1258 = vld [vmem:[%s87 + $0x24] sm:$0xf]
    %v1259 = vld [vmem:[%s87 + $0x28] sm:$0xf]
    %v1260 = vld [vmem:[%s87 + $0x2c] sm:$0xf]
    %v1261 = vld [vmem:[%s87 + $0x30] sm:$0xf]
    %v1262 = vld [vmem:[%s87 + $0x34] sm:$0xf]
    %v1263 = vld [vmem:[%s87 + $0x38] sm:$0xf]
    %v1264 = vld [vmem:[%s87 + $0x3c] sm:$0xf]
    %v1265 = vld [vmem:[%s87 + $0x40] sm:$0xf]
    %v1266 = vld [vmem:[%s87 + $0x44] sm:$0xf]
    %v1267 = vld [vmem:[%s87 + $0x48] sm:$0xf]
    %v1268 = vld [vmem:[%s87 + $0x4c] sm:$0xf]
    %v1269 = vld [vmem:[%s87 + $0x50] sm:$0xf]
    %v1270 = vld [vmem:[%s87 + $0x54] sm:$0xf]
    %v1271 = vld [vmem:[%s87 + $0x58] sm:$0xf]
    %v1272 = vld [vmem:[%s87 + $0x5c] sm:$0xf]
    %v1273 = vld [vmem:[%s87 + $0x60] sm:$0xf]
    %v1274 = vld [vmem:[%s87 + $0x64] sm:$0xf]
    %v1275 = vld [vmem:[%s87 + $0x68] sm:$0xf]
    %v1276 = vld [vmem:[%s87 + $0x6c] sm:$0xf]
    %v1277 = vld [vmem:[%s87 + $0x70] sm:$0xf]
    %v1278 = vld [vmem:[%s87 + $0x74] sm:$0xf]
    %v1279 = vld [vmem:[%s87 + $0x78] sm:$0xf]
    %v1280 = vld [vmem:[%s87 + $0x7c] sm:$0xf]
    %v1281 = vld [vmem:[%s87 + $0x80] sm:$0xf]
    %v1282 = vld [vmem:[%s87 + $0x84] sm:$0xf]
    %v1283 = vld [vmem:[%s87 + $0x88] sm:$0xf]
    %v1284 = vld [vmem:[%s87 + $0x8c] sm:$0xf]
    %v1285 = vld [vmem:[%s87 + $0x90] sm:$0xf]
    %v1286 = vld [vmem:[%s87 + $0x94] sm:$0xf]
    %v1287 = vld [vmem:[%s87 + $0x98] sm:$0xf]
    %v1288 = vld [vmem:[%s87 + $0x9c] sm:$0xf]
    %v1289 = vld [vmem:[%s87 + $0xa0] sm:$0xf]
    %v1290 = vld [vmem:[%s87 + $0xa4] sm:$0xf]
    %v1291 = vld [vmem:[%s87 + $0xa8] sm:$0xf]
    %v1292 = vld [vmem:[%s87 + $0xac] sm:$0xf]
    %v1293 = vld [vmem:[%s87 + $0xb0] sm:$0xf]
    %v1294 = vld [vmem:[%s87 + $0xb4] sm:$0xf]
    %v1295 = vld [vmem:[%s87 + $0xb8] sm:$0xf]
    %v1296 = vld [vmem:[%s87 + $0xbc] sm:$0xf]
    %v1297 = vld [vmem:[%s87 + $0xc0] sm:$0xf]
    %v1298 = vld [vmem:[%s87 + $0xc4] sm:$0xf]
    %v1299 = vld [vmem:[%s87 + $0xc8] sm:$0xf]
    %v1300 = vld [vmem:[%s87 + $0xcc] sm:$0xf]
    %v1301 = vld [vmem:[%s87 + $0xd0] sm:$0xf]
    %v1302 = vld [vmem:[%s87 + $0xd4] sm:$0xf]
    %v1303 = vld [vmem:[%s87 + $0xd8] sm:$0xf]
    %v1304 = vld [vmem:[%s87 + $0xdc] sm:$0xf]
    %v1305 = vld [vmem:[%s87 + $0xe0] sm:$0xf]
    %v1306 = vld [vmem:[%s87 + $0xe4] sm:$0xf]
    %v1307 = vld [vmem:[%s87 + $0xe8] sm:$0xf]
    %v1308 = vld [vmem:[%s87 + $0xec] sm:$0xf]
    %v1309 = vld [vmem:[%s87 + $0xf0] sm:$0xf]
    %v1310 = vld [vmem:[%s87 + $0xf4] sm:$0xf]
    %v1311 = vld [vmem:[%s87 + $0xf8] sm:$0xf]
    %v1312 = vld [vmem:[%s87 + $0xfc] sm:$0xf]
    %v1313 = vld [vmem:[%s87 + $0x100] sm:$0xf]
    %v1314 = vld [vmem:[%s87 + $0x104] sm:$0xf]
    %v1315 = vld [vmem:[%s87 + $0x108] sm:$0xf]
    %v1316 = vld [vmem:[%s87 + $0x10c] sm:$0xf]
    %v1317 = vld [vmem:[%s87 + $0x110] sm:$0xf]
    %v1318 = vld [vmem:[%s87 + $0x114] sm:$0xf]
    %v1319 = vld [vmem:[%s87 + $0x118] sm:$0xf]
    %v1320 = vld [vmem:[%s87 + $0x11c] sm:$0xf]
    %v1321 = vld [vmem:[%s87 + $0x120] sm:$0xf]
    %v1322 = vld [vmem:[%s87 + $0x124] sm:$0xf]
    %v1323 = vld [vmem:[%s87 + $0x128] sm:$0xf]
    %v1324 = vld [vmem:[%s87 + $0x12c] sm:$0xf]
    %v1325 = vld [vmem:[%s87 + $0x130] sm:$0xf]
    %v1326 = vld [vmem:[%s87 + $0x134] sm:$0xf]
    %v1327 = vld [vmem:[%s87 + $0x138] sm:$0xf]
    %v1328 = vld [vmem:[%s87 + $0x13c] sm:$0xf]
    %v1329 = vld [vmem:[%s87 + $0x140] sm:$0xf]
    %v1330 = vld [vmem:[%s87 + $0x144] sm:$0xf]
    %v1331 = vld [vmem:[%s87 + $0x148] sm:$0xf]
    %v1332 = vld [vmem:[%s87 + $0x14c] sm:$0xf]
    %v1333 = vld [vmem:[%s87 + $0x150] sm:$0xf]
    %v1334 = vld [vmem:[%s87 + $0x154] sm:$0xf]
    %v1335 = vld [vmem:[%s87 + $0x158] sm:$0xf]
    %v1336 = vld [vmem:[%s87 + $0x15c] sm:$0xf]
    %v1337 = vld [vmem:[%s87 + $0x160] sm:$0xf]
    %v1338 = vld [vmem:[%s87 + $0x164] sm:$0xf]
    %v1339 = vld [vmem:[%s87 + $0x168] sm:$0xf]
    %v1340 = vld [vmem:[%s87 + $0x16c] sm:$0xf]
    %v1341 = vld [vmem:[%s87 + $0x170] sm:$0xf]
    %v1342 = vld [vmem:[%s87 + $0x174] sm:$0xf]
    %v1343 = vld [vmem:[%s87 + $0x178] sm:$0xf]
    %v1344 = vld [vmem:[%s87 + $0x17c] sm:$0xf]
    %v1345 = vld [vmem:[%s87 + $0x180] sm:$0xf]
    %v1346 = vld [vmem:[%s87 + $0x184] sm:$0xf]
    %v1347 = vld [vmem:[%s87 + $0x188] sm:$0xf]
    %v1348 = vld [vmem:[%s87 + $0x18c] sm:$0xf]
    %v1349 = vld [vmem:[%s87 + $0x190] sm:$0xf]
    %v1350 = vld [vmem:[%s87 + $0x194] sm:$0xf]
    %v1351 = vld [vmem:[%s87 + $0x198] sm:$0xf]
    %v1352 = vld [vmem:[%s87 + $0x19c] sm:$0xf]
    %v1353 = vld [vmem:[%s87 + $0x1a0] sm:$0xf]
    %v1354 = vld [vmem:[%s87 + $0x1a4] sm:$0xf]
    %v1355 = vld [vmem:[%s87 + $0x1a8] sm:$0xf]
    %v1356 = vld [vmem:[%s87 + $0x1ac] sm:$0xf]
    %v1357 = vld [vmem:[%s87 + $0x1b0] sm:$0xf]
    %v1358 = vld [vmem:[%s87 + $0x1b4] sm:$0xf]
    %v1359 = vld [vmem:[%s87 + $0x1b8] sm:$0xf]
    %v1360 = vld [vmem:[%s87 + $0x1bc] sm:$0xf]
    %v1361 = vld [vmem:[%s87 + $0x1c0] sm:$0xf]
    %v1362 = vld [vmem:[%s87 + $0x1c4] sm:$0xf]
    %v1363 = vld [vmem:[%s87 + $0x1c8] sm:$0xf]
    %v1364 = vld [vmem:[%s87 + $0x1cc] sm:$0xf]
    %v1365 = vld [vmem:[%s87 + $0x1d0] sm:$0xf]
    %v1366 = vld [vmem:[%s87 + $0x1d4] sm:$0xf]
    %v1367 = vld [vmem:[%s87 + $0x1d8] sm:$0xf]
    %v1368 = vld [vmem:[%s87 + $0x1dc] sm:$0xf]
    %v1369 = vld [vmem:[%s87 + $0x1e0] sm:$0xf]
    %v1370 = vld [vmem:[%s87 + $0x1e4] sm:$0xf]
    %v1371 = vld [vmem:[%s87 + $0x1e8] sm:$0xf]
    %v1372 = vld [vmem:[%s87 + $0x1ec] sm:$0xf]
    %v1373 = vld [vmem:[%s87 + $0x1f0] sm:$0xf]
    %v1374 = vld [vmem:[%s87 + $0x1f4] sm:$0xf]
    %v1375 = vld [vmem:[%s87 + $0x1f8] sm:$0xf]
    %v1376 = vld [vmem:[%s87 + $0x1fc] sm:$0xf]
    %v1505 = vunpack.c.l.b16 %v1249
    %v1506 = vunpack.c.l.b16 %v1250
    %v1507 = vunpack.c.l.b16 %v1251
    %v1508 = vunpack.c.l.b16 %v1252
    %v1509 = vunpack.c.l.b16 %v1253
    %v1510 = vunpack.c.l.b16 %v1254
    %v1511 = vunpack.c.l.b16 %v1255
    %v1512 = vunpack.c.l.b16 %v1256
    %v1513 = vunpack.c.l.b16 %v1257
    %v1514 = vunpack.c.l.b16 %v1258
    %v1515 = vunpack.c.l.b16 %v1259
    %v1516 = vunpack.c.l.b16 %v1260
    %v1517 = vunpack.c.l.b16 %v1261
    %v1518 = vunpack.c.l.b16 %v1262
    %v1519 = vunpack.c.l.b16 %v1263
    %v1520 = vunpack.c.l.b16 %v1264
    %v1521 = vunpack.c.l.b16 %v1265
    %v1522 = vunpack.c.l.b16 %v1266
    %v1523 = vunpack.c.l.b16 %v1267
    %v1524 = vunpack.c.l.b16 %v1268
    %v1525 = vunpack.c.l.b16 %v1269
    %v1526 = vunpack.c.l.b16 %v1270
    %v1527 = vunpack.c.l.b16 %v1271
    %v1528 = vunpack.c.l.b16 %v1272
    %v1529 = vunpack.c.l.b16 %v1273
    %v1530 = vunpack.c.l.b16 %v1274
    %v1531 = vunpack.c.l.b16 %v1275
    %v1532 = vunpack.c.l.b16 %v1276
    %v1533 = vunpack.c.l.b16 %v1277
    %v1534 = vunpack.c.l.b16 %v1278
    %v1535 = vunpack.c.l.b16 %v1279
    %v1536 = vunpack.c.l.b16 %v1280
    %v1537 = vunpack.c.l.b16 %v1281
    %v1538 = vunpack.c.l.b16 %v1282
    %v1539 = vunpack.c.l.b16 %v1283
    %v1540 = vunpack.c.l.b16 %v1284
    %v1541 = vunpack.c.l.b16 %v1285
    %v1542 = vunpack.c.l.b16 %v1286
    %v1543 = vunpack.c.l.b16 %v1287
    %v1544 = vunpack.c.l.b16 %v1288
    %v1545 = vunpack.c.l.b16 %v1289
    %v1546 = vunpack.c.l.b16 %v1290
    %v1547 = vunpack.c.l.b16 %v1291
    %v1548 = vunpack.c.l.b16 %v1292
    %v1549 = vunpack.c.l.b16 %v1293
    %v1550 = vunpack.c.l.b16 %v1294
    %v1551 = vunpack.c.l.b16 %v1295
    %v1552 = vunpack.c.l.b16 %v1296
    %v1553 = vunpack.c.l.b16 %v1297
    %v1554 = vunpack.c.l.b16 %v1298
    %v1555 = vunpack.c.l.b16 %v1299
    %v1556 = vunpack.c.l.b16 %v1300
    %v1557 = vunpack.c.l.b16 %v1301
    %v1558 = vunpack.c.l.b16 %v1302
    %v1559 = vunpack.c.l.b16 %v1303
    %v1560 = vunpack.c.l.b16 %v1304
    %v1561 = vunpack.c.l.b16 %v1305
    %v1562 = vunpack.c.l.b16 %v1306
    %v1563 = vunpack.c.l.b16 %v1307
    %v1564 = vunpack.c.l.b16 %v1308
    %v1565 = vunpack.c.l.b16 %v1309
    %v1566 = vunpack.c.l.b16 %v1310
    %v1567 = vunpack.c.l.b16 %v1311
    %v1568 = vunpack.c.l.b16 %v1312
    %v1569 = vunpack.c.l.b16 %v1313
    %v1570 = vunpack.c.l.b16 %v1314
    %v1571 = vunpack.c.l.b16 %v1315
    %v1572 = vunpack.c.l.b16 %v1316
    %v1573 = vunpack.c.l.b16 %v1317
    %v1574 = vunpack.c.l.b16 %v1318
    %v1575 = vunpack.c.l.b16 %v1319
    %v1576 = vunpack.c.l.b16 %v1320
    %v1577 = vunpack.c.l.b16 %v1321
    %v1578 = vunpack.c.l.b16 %v1322
    %v1579 = vunpack.c.l.b16 %v1323
    %v1580 = vunpack.c.l.b16 %v1324
    %v1581 = vunpack.c.l.b16 %v1325
    %v1582 = vunpack.c.l.b16 %v1326
    %v1583 = vunpack.c.l.b16 %v1327
    %v1584 = vunpack.c.l.b16 %v1328
    %v1585 = vunpack.c.l.b16 %v1329
    %v1586 = vunpack.c.l.b16 %v1330
    %v1587 = vunpack.c.l.b16 %v1331
    %v1588 = vunpack.c.l.b16 %v1332
    %v1589 = vunpack.c.l.b16 %v1333
    %v1590 = vunpack.c.l.b16 %v1334
    %v1591 = vunpack.c.l.b16 %v1335
    %v1592 = vunpack.c.l.b16 %v1336
    %v1593 = vunpack.c.l.b16 %v1337
    %v1594 = vunpack.c.l.b16 %v1338
    %v1595 = vunpack.c.l.b16 %v1339
    %v1596 = vunpack.c.l.b16 %v1340
    %v1597 = vunpack.c.l.b16 %v1341
    %v1598 = vunpack.c.l.b16 %v1342
    %v1599 = vunpack.c.l.b16 %v1343
    %v1600 = vunpack.c.l.b16 %v1344
    %v1601 = vunpack.c.l.b16 %v1345
    %v1602 = vunpack.c.l.b16 %v1346
    %v1603 = vunpack.c.l.b16 %v1347
    %v1604 = vunpack.c.l.b16 %v1348
    %v1605 = vunpack.c.l.b16 %v1349
    %v1606 = vunpack.c.l.b16 %v1350
    %v1607 = vunpack.c.l.b16 %v1351
    %v1608 = vunpack.c.l.b16 %v1352
    %v1609 = vunpack.c.l.b16 %v1353
    %v1610 = vunpack.c.l.b16 %v1354
    %v1611 = vunpack.c.l.b16 %v1355
    %v1612 = vunpack.c.l.b16 %v1356
    %v1613 = vunpack.c.l.b16 %v1357
    %v1614 = vunpack.c.l.b16 %v1358
    %v1615 = vunpack.c.l.b16 %v1359
    %v1616 = vunpack.c.l.b16 %v1360
    %v1617 = vunpack.c.l.b16 %v1361
    %v1618 = vunpack.c.l.b16 %v1362
    %v1619 = vunpack.c.l.b16 %v1363
    %v1620 = vunpack.c.l.b16 %v1364
    %v1621 = vunpack.c.l.b16 %v1365
    %v1622 = vunpack.c.l.b16 %v1366
    %v1623 = vunpack.c.l.b16 %v1367
    %v1624 = vunpack.c.l.b16 %v1368
    %v1625 = vunpack.c.l.b16 %v1369
    %v1626 = vunpack.c.l.b16 %v1370
    %v1627 = vunpack.c.l.b16 %v1371
    %v1628 = vunpack.c.l.b16 %v1372
    %v1629 = vunpack.c.l.b16 %v1373
    %v1630 = vunpack.c.l.b16 %v1374
    %v1631 = vunpack.c.l.b16 %v1375
    %v1632 = vunpack.c.l.b16 %v1376
    %v1633 = vpack.c.b16 %v1506, %v1505
    %v1634 = vpack.c.b16 %v1508, %v1507
    %v1635 = vpack.c.b16 %v1510, %v1509
    %v1636 = vpack.c.b16 %v1512, %v1511
    %v1637 = vpack.c.b16 %v1514, %v1513
    %v1638 = vpack.c.b16 %v1516, %v1515
    %v1639 = vpack.c.b16 %v1518, %v1517
    %v1640 = vpack.c.b16 %v1520, %v1519
    %v1641 = vpack.c.b16 %v1522, %v1521
    %v1642 = vpack.c.b16 %v1524, %v1523
    %v1643 = vpack.c.b16 %v1526, %v1525
    %v1644 = vpack.c.b16 %v1528, %v1527
    %v1645 = vpack.c.b16 %v1530, %v1529
    %v1646 = vpack.c.b16 %v1532, %v1531
    %v1647 = vpack.c.b16 %v1534, %v1533
    %v1648 = vpack.c.b16 %v1536, %v1535
    %v1649 = vpack.c.b16 %v1538, %v1537
    %v1650 = vpack.c.b16 %v1540, %v1539
    %v1651 = vpack.c.b16 %v1542, %v1541
    %v1652 = vpack.c.b16 %v1544, %v1543
    %v1653 = vpack.c.b16 %v1546, %v1545
    %v1654 = vpack.c.b16 %v1548, %v1547
    %v1655 = vpack.c.b16 %v1550, %v1549
    %v1656 = vpack.c.b16 %v1552, %v1551
    %v1657 = vpack.c.b16 %v1554, %v1553
    %v1658 = vpack.c.b16 %v1556, %v1555
    %v1659 = vpack.c.b16 %v1558, %v1557
    %v1660 = vpack.c.b16 %v1560, %v1559
    %v1661 = vpack.c.b16 %v1562, %v1561
    %v1662 = vpack.c.b16 %v1564, %v1563
    %v1663 = vpack.c.b16 %v1566, %v1565
    %v1664 = vpack.c.b16 %v1568, %v1567
    %v1665 = vpack.c.b16 %v1570, %v1569
    %v1666 = vpack.c.b16 %v1572, %v1571
    %v1667 = vpack.c.b16 %v1574, %v1573
    %v1668 = vpack.c.b16 %v1576, %v1575
    %v1669 = vpack.c.b16 %v1578, %v1577
    %v1670 = vpack.c.b16 %v1580, %v1579
    %v1671 = vpack.c.b16 %v1582, %v1581
    %v1672 = vpack.c.b16 %v1584, %v1583
    %v1673 = vpack.c.b16 %v1586, %v1585
    %v1674 = vpack.c.b16 %v1588, %v1587
    %v1675 = vpack.c.b16 %v1590, %v1589
    %v1676 = vpack.c.b16 %v1592, %v1591
    %v1677 = vpack.c.b16 %v1594, %v1593
    %v1678 = vpack.c.b16 %v1596, %v1595
    %v1679 = vpack.c.b16 %v1598, %v1597
    %v1680 = vpack.c.b16 %v1600, %v1599
    %v1681 = vpack.c.b16 %v1602, %v1601
    %v1682 = vpack.c.b16 %v1604, %v1603
    %v1683 = vpack.c.b16 %v1606, %v1605
    %v1684 = vpack.c.b16 %v1608, %v1607
    %v1685 = vpack.c.b16 %v1610, %v1609
    %v1686 = vpack.c.b16 %v1612, %v1611
    %v1687 = vpack.c.b16 %v1614, %v1613
    %v1688 = vpack.c.b16 %v1616, %v1615
    %v1689 = vpack.c.b16 %v1618, %v1617
    %v1690 = vpack.c.b16 %v1620, %v1619
    %v1691 = vpack.c.b16 %v1622, %v1621
    %v1692 = vpack.c.b16 %v1624, %v1623
    %v1693 = vpack.c.b16 %v1626, %v1625
    %v1694 = vpack.c.b16 %v1628, %v1627
    %v1695 = vpack.c.b16 %v1630, %v1629
    %v1696 = vpack.c.b16 %v1632, %v1631
    %1761 = vmatpush.bf16.msra.mxu0 %v1640
    %1762 = vmatpush.bf16.msra.mxu0 %v1639
    %1763 = vmatpush.bf16.msra.mxu0 %v1638
    %1764 = vmatpush.bf16.msra.mxu0 %v1637
    %1765 = vmatpush.bf16.msra.mxu0 %v1636
    %1766 = vmatpush.bf16.msra.mxu0 %v1635
    %1767 = vmatpush.bf16.msra.mxu0 %v1634
    %1768 = vmatpush.bf16.msra.mxu0 %v1633
    %1769 = vmatmul.bf16.gmra.mxu0 %v1208
    %v1770 = vpop.f32.mrf.mxu0
    %v1771 = vadd.f32 0.0, %v1770
    %v1772 = vpop.f32.mrf.mxu0
    %v1773 = vadd.f32 0.0, %v1772
    %1774 = vdwg.mxu0
    %1775 = vmatpush.bf16.msra.mxu0 %v1648
    %1776 = vmatpush.bf16.msra.mxu0 %v1647
    %1777 = vmatpush.bf16.msra.mxu0 %v1646
    %1778 = vmatpush.bf16.msra.mxu0 %v1645
    %1779 = vmatpush.bf16.msra.mxu0 %v1644
    %1780 = vmatpush.bf16.msra.mxu0 %v1643
    %1781 = vmatpush.bf16.msra.mxu0 %v1642
    %1782 = vmatpush.bf16.msra.mxu0 %v1641
    %1783 = vmatmul.bf16.gmra.mxu0 %v1209
    %v1784 = vpop.f32.mrf.mxu0
    %v1785 = vadd.f32 %v1771, %v1784
    %v1786 = vpop.f32.mrf.mxu0
    %v1787 = vadd.f32 %v1773, %v1786
    %1788 = vdwg.mxu0
    %1789 = vmatpush.bf16.msra.mxu0 %v1656
    %1790 = vmatpush.bf16.msra.mxu0 %v1655
    %1791 = vmatpush.bf16.msra.mxu0 %v1654
    %1792 = vmatpush.bf16.msra.mxu0 %v1653
    %1793 = vmatpush.bf16.msra.mxu0 %v1652
    %1794 = vmatpush.bf16.msra.mxu0 %v1651
    %1795 = vmatpush.bf16.msra.mxu0 %v1650
    %1796 = vmatpush.bf16.msra.mxu0 %v1649
    %1797 = vmatmul.bf16.gmra.mxu0 %v1210
    %v1798 = vpop.f32.mrf.mxu0
    %v1799 = vadd.f32 %v1785, %v1798
    %v1800 = vpop.f32.mrf.mxu0
    %v1801 = vadd.f32 %v1787, %v1800
    %1802 = vdwg.mxu0
    %1803 = vmatpush.bf16.msra.mxu0 %v1664
    %1804 = vmatpush.bf16.msra.mxu0 %v1663
    %1805 = vmatpush.bf16.msra.mxu0 %v1662
    %1806 = vmatpush.bf16.msra.mxu0 %v1661
    %1807 = vmatpush.bf16.msra.mxu0 %v1660
    %1808 = vmatpush.bf16.msra.mxu0 %v1659
    %1809 = vmatpush.bf16.msra.mxu0 %v1658
    %1810 = vmatpush.bf16.msra.mxu0 %v1657
    %1811 = vmatmul.bf16.gmra.mxu0 %v1211
    %v1812 = vpop.f32.mrf.mxu0
    %v1813 = vadd.f32 %v1799, %v1812
    %v1814 = vpop.f32.mrf.mxu0
    %v1815 = vadd.f32 %v1801, %v1814
    %1816 = vdwg.mxu0
    %1817 = vmatpush.bf16.msra.mxu0 %v1672
    %1818 = vmatpush.bf16.msra.mxu0 %v1671
    %1819 = vmatpush.bf16.msra.mxu0 %v1670
    %1820 = vmatpush.bf16.msra.mxu0 %v1669
    %1821 = vmatpush.bf16.msra.mxu0 %v1668
    %1822 = vmatpush.bf16.msra.mxu0 %v1667
    %1823 = vmatpush.bf16.msra.mxu0 %v1666
    %1824 = vmatpush.bf16.msra.mxu0 %v1665
    %1825 = vmatmul.bf16.gmra.mxu0 %v1212
    %v1826 = vpop.f32.mrf.mxu0
    %v1827 = vadd.f32 %v1813, %v1826
    %v1828 = vpop.f32.mrf.mxu0
    %v1829 = vadd.f32 %v1815, %v1828
    %1830 = vdwg.mxu0
    %1831 = vmatpush.bf16.msra.mxu0 %v1680
    %1832 = vmatpush.bf16.msra.mxu0 %v1679
    %1833 = vmatpush.bf16.msra.mxu0 %v1678
    %1834 = vmatpush.bf16.msra.mxu0 %v1677
    %1835 = vmatpush.bf16.msra.mxu0 %v1676
    %1836 = vmatpush.bf16.msra.mxu0 %v1675
    %1837 = vmatpush.bf16.msra.mxu0 %v1674
    %1838 = vmatpush.bf16.msra.mxu0 %v1673
    %1839 = vmatmul.bf16.gmra.mxu0 %v1213
    %v1840 = vpop.f32.mrf.mxu0
    %v1841 = vadd.f32 %v1827, %v1840
    %v1842 = vpop.f32.mrf.mxu0
    %v1843 = vadd.f32 %v1829, %v1842
    %1844 = vdwg.mxu0
    %1845 = vmatpush.bf16.msra.mxu0 %v1688
    %1846 = vmatpush.bf16.msra.mxu0 %v1687
    %1847 = vmatpush.bf16.msra.mxu0 %v1686
    %1848 = vmatpush.bf16.msra.mxu0 %v1685
    %1849 = vmatpush.bf16.msra.mxu0 %v1684
    %1850 = vmatpush.bf16.msra.mxu0 %v1683
    %1851 = vmatpush.bf16.msra.mxu0 %v1682
    %1852 = vmatpush.bf16.msra.mxu0 %v1681
    %1853 = vmatmul.bf16.gmra.mxu0 %v1214
    %v1854 = vpop.f32.mrf.mxu0
    %v1855 = vadd.f32 %v1841, %v1854
    %v1856 = vpop.f32.mrf.mxu0
    %v1857 = vadd.f32 %v1843, %v1856
    %1858 = vdwg.mxu0
    %1859 = vmatpush.bf16.msra.mxu0 %v1696
    %1860 = vmatpush.bf16.msra.mxu0 %v1695
    %1861 = vmatpush.bf16.msra.mxu0 %v1694
    %1862 = vmatpush.bf16.msra.mxu0 %v1693
    %1863 = vmatpush.bf16.msra.mxu0 %v1692
    %1864 = vmatpush.bf16.msra.mxu0 %v1691
    %1865 = vmatpush.bf16.msra.mxu0 %v1690
    %1866 = vmatpush.bf16.msra.mxu0 %v1689
    %1867 = vmatmul.bf16.gmra.mxu0 %v1215
    %v1868 = vpop.f32.mrf.mxu0
    %v1869 = vadd.f32 %v1855, %v1868
    %v1870 = vpop.f32.mrf.mxu0
    %v1871 = vadd.f32 %v1857, %v1870
    %1872 = vdwg.mxu0
    %v1873 = vadd.f32 %v1247, %v1869
    %v1874 = vadd.f32 %v1248, %v1871
    %1875 = vst.msk [vmem:[#allocation2] sm:$0xff] %vm221, %v1873
    %1876 = vst.msk [vmem:[#allocation2 + $0x8] sm:$0xff] %vm221, %v1874
    // Predicated region
    $region38: #{self_refining_moe_forward.3} parent=1 // pred_check
      _
    $region39: #{self_refining_moe_forward.3} parent=1 // pred_check_branch
      %1878 = sbr.rel (0) target = $region41
    $region40: #{self_refining_moe_forward.3} parent=1 // pred_region
      %1880 = vsyncadd [#allocation3], 0
      %s1881 = sshll.u32 [#allocation2], 4
      %s1882 = int_to_ptr.vmem [resolvable:$true] %s1881
      %s1883 = sshll.u32 %s7, 4
      %s1884 = int_to_ptr.hbm [resolvable:$true] %s1883
      %1889 = dma.vmem_to_hbm [thread:$0]  %s1882, 256, %s1884, [#allocation3], 128, 128, 8
    $region41: #{self_refining_moe_forward.3} parent=1 // pred_fallthru
      _
    // Predicated region
    $region42: #{self_refining_moe_forward.3} parent=1 // pred_check
      _
    $region43: #{self_refining_moe_forward.3} parent=1 // pred_check_branch
      %1891 = sbr.rel (0) target = $region45
    $region44: #{self_refining_moe_forward.3} parent=1 // pred_region
      %1893 = dma.done [#allocation3], 256
    $region45: #{self_refining_moe_forward.3} parent=1 // pred_fallthru
      _
    %1894 = vsyncpa [#allocation3], 1

</llo_original>
